<compile_context>
chip_gen: v5e
topology: v5e:2x2
jax: 0.10.0
libtpu: 0.0.40
codegen_flags: <defaults>
</compile_context>

<pallas_src>
import functools
import math

import jax
import jax.numpy as jnp
from jax.experimental import pallas as pl
from jax.experimental.pallas import tpu as pltpu


# ----------------------------- kernel helpers ------------------------------

def _layernorm(x, gamma, beta, eps=1e-5):
    mu = jnp.mean(x, axis=-1, keepdims=True)
    xc = x - mu
    var = jnp.mean(xc * xc, axis=-1, keepdims=True)
    inv = jax.lax.rsqrt(var + eps)
    return xc * inv * gamma + beta


# --------------------------------- kernel ----------------------------------

def encoder_layer_kernel(nhead, matmul_dtype, need_weights, *refs):
    (src_ref, pos_ref,
     wq_ref, wk_ref, wv_ref, bq_ref, bk_ref, bv_ref,
     wo_ref, bo_ref, g1_ref, be1_ref,
     w1_ref, b1_ref, w2_ref, b2_ref, g2_ref, be2_ref) = refs[:18]
    out_ref = refs[18]
    if need_weights:
        attn_ref = refs[19]
        ctx_scratch = refs[20]
    else:
        attn_ref = None
        ctx_scratch = refs[19]

    TB, S, D = src_ref.shape
    hd = D // nhead
    N = TB * S
    f32 = jnp.float32

    def mm(x):  # MXU operand dtype (bf16 on v6e/v7x); accumulation stays f32.
        return x if matmul_dtype is None else x.astype(matmul_dtype)

    src = src_ref[...].astype(f32)                 # (TB, S, D)
    qk_in = src + pos_ref[...].astype(f32)         # with_pos_embed(src, pos)

    # Flatten all tokens of the batch block: dense matmuls see N = TB*S rows.
    src2 = src.reshape(N, D)
    qk2 = qk_in.reshape(N, D)

    def linear(x, w_ref, b_ref):
        # Weights arrive host-side pre-transposed to (in, out) and already in
        # the MXU operand dtype: plain ((1,),(0,)) contraction, no in-kernel
        # weight transpose / cast.
        y = jnp.dot(mm(x), w_ref[...], preferred_element_type=f32)
        return y + b_ref[...].astype(f32)

    # In-projections.  PyTorch's 1/sqrt(head_dim) q-scaling is folded into
    # wq / bq on the host, so there is no per-call (N, D) multiply here.
    q = linear(qk2, wq_ref, bq_ref)
    k = linear(qk2, wk_ref, bk_ref)
    v = linear(src2, wv_ref, bv_ref)

    # Hoist the matmul-operand cast out of the head loop (one cast per tensor).
    q3 = mm(q).reshape(TB, S, D)
    k3 = mm(k).reshape(TB, S, D)
    v3 = mm(v).reshape(TB, S, D)

    inv_nhead = 1.0 / nhead

    # Static head loop; every iteration ends with VMEM-ref stores (context
    # scratch + attn output accumulation), so only one head's (TB, S, S)
    # score/prob tensors are live at a time.
    # TODO(synk): for hd < 128 the lane slices below are sub-lane-tile; real
    # model configs should pad hd (or D) to a multiple of 128.
    for h in range(nhead):
        lo = h * hd
        qh = q3[:, :, lo:lo + hd]                  # (TB, S, hd)
        kh = k3[:, :, lo:lo + hd]
        vh = v3[:, :, lo:lo + hd]

        s = jnp.einsum('bqd,bkd->bqk', qh, kh,
                       preferred_element_type=f32)           # (TB, S, S)
        s = s - jnp.max(s, axis=-1, keepdims=True)
        p = jnp.exp(s)
        # Exact reciprocal so returned attention rows sum to 1 (weights are
        # consumed downstream as 'enc_tc_self_att').
        p = p * pl.reciprocal(jnp.sum(p, axis=-1, keepdims=True))

        if attn_ref is not None:
            contrib = (p * inv_nhead).astype(attn_ref.dtype)
            if h == 0:
                attn_ref[...] = contrib
            else:
                attn_ref[...] = attn_ref[...] + contrib

        ctx = jnp.einsum('bqk,bkd->bqd', mm(p), vh,
                         preferred_element_type=f32)          # (TB, S, hd)
        # Store this head's context at its lane offset; the output projection
        # below then runs as a single K = D matmul (full MXU depth) instead of
        # nhead K = hd matmuls + nhead VALU accumulates.
        ctx_scratch[:, lo:lo + hd] = ctx.reshape(N, hd).astype(ctx_scratch.dtype)

    attn_out = jnp.dot(ctx_scratch[...], wo_ref[...],
                       preferred_element_type=f32) + bo_ref[...].astype(f32)

    # SelfAttResidual: LayerNorm(src + dropout(attn_out)); dropout = identity.
    x1 = _layernorm(src2 + attn_out,
                    g1_ref[...].astype(f32), be1_ref[...].astype(f32))

    # FFResidual: LayerNorm(x1 + dropout(Linear2(ReLU(Linear1(x1))))).
    h1 = jnp.maximum(linear(x1, w1_ref, b1_ref), 0.0)
    ff = linear(h1, w2_ref, b2_ref)
    y = _layernorm(x1 + ff, g2_ref[...].astype(f32), be2_ref[...].astype(f32))

    out_ref[...] = y.reshape(TB, S, D).astype(out_ref.dtype)


# -------------------------------- wrapper -----------------------------------

_PARAM_ORDER = ("wq", "wk", "wv", "bq", "bk", "bv",
                "wo", "bo", "g1", "be1",
                "w1", "b1", "w2", "b2", "g2", "be2")


def init_params(key, d_model, nhead, dim_feedforward):
    """Deterministic synthetic parameters in the torch nn.Module layout."""
    D, F = d_model, dim_feedforward
    ks = jax.random.split(key, 12)

    def u(k, shape, fan_in):
        bound = 1.0 / math.sqrt(fan_in)
        return jax.random.uniform(k, shape, jnp.float32, -bound, bound)

    return {
        "wq": u(ks[0], (D, D), D), "wk": u(ks[1], (D, D), D), "wv": u(ks[2], (D, D), D),
        "bq": u(ks[3], (1, D), D), "bk": u(ks[4], (1, D), D), "bv": u(ks[5], (1, D), D),
        "wo": u(ks[6], (D, D), D), "bo": u(ks[7], (1, D), D),
        "g1": jnp.ones((1, D), jnp.float32), "be1": jnp.zeros((1, D), jnp.float32),
        "w1": u(ks[8], (F, D), D), "b1": u(ks[9], (1, F), D),
        "w2": u(ks[10], (D, F), F), "b2": u(ks[11], (1, D), F),
        "g2": jnp.ones((1, D), jnp.float32), "be2": jnp.zeros((1, D), jnp.float32),
    }


def _tpu_generation():
    try:
        kind = jax.devices()[0].device_kind.lower()
    except Exception:
        return "unknown"
    if "v7" in kind:
        return "v7x"
    if "v6" in kind:
        return "v6e"
    if "v5" in kind:
        return "v5e"
    return "unknown"


def _vmem_limit_bytes(gen):
    # v7x has 64 MiB physical VMEM per TensorCore -> leave headroom for
    # compiler-internal scratch; v5e/v6e have 128 MiB -> raise well past the
    # 32 MiB scoped default so large batch blocks fit.
    if gen == "v7x":
        return 48 * 1024 * 1024
    if gen in ("v6e", "v5e"):
        return 100 * 1024 * 1024
    return 64 * 1024 * 1024


def _choose_block_b(B, S, D, F, need_weights, gen, weight_bytes, matmul_bytes,
                    vmem_budget):
    # Target enough flattened rows per grid step to fill the MXU M dimension
    # (>=512 on single-TC v5e/v6e; >=256 on v7x where VMEM is the limiter).
    target_rows = 256 if gen == "v7x" else 512
    block_b = max(1, min(B, pl.cdiv(target_rows, max(S, 1))))
    # Only v7x has 2 TensorCores sharing the "parallel" grid axis: keep >=2
    # grid steps there.  Single-TC v5e/v6e run the grid serially, so do not
    # split the batch just to add grid steps.
    if gen == "v7x" and B >= 2:
        block_b = min(block_b, max(1, B // 2))
    while B % block_b:
        block_b -= 1

    def estimate(bb):
        n = bb * S
        act = bb * S * D * 4
        attn = bb * S * S * 4 if need_weights else 0
        io = 2 * 2 * act + 2 * (act + attn)          # double-buffered in/out blocks
        weights = 2 * weight_bytes                    # default double-buffered
        scratch = n * D * matmul_bytes                # per-head context scratch
        temps = (3 * n * D * 4                        # q, k, v
                 + n * F * 4                          # FFN hidden
                 + 3 * bb * S * S * 4                 # one head's scores/probs
                 + 2 * n * D * 4)                     # residual temporaries
        return io + weights + scratch + temps

    while block_b > 1 and estimate(block_b) > vmem_budget:
        block_b -= 1
        while B % block_b:
            block_b -= 1
    return block_b


def _prepare_weights(params, nhead, matmul_dtype):
    """Host-side parameter prep: fold the 1/sqrt(hd) q-scale into wq/bq,
    pre-transpose torch (out,in) weights to (in,out), cast matmul weights to
    the MXU operand dtype (biases / LayerNorm params stay f32)."""
    D = params["wq"].shape[0]
    hd = D // nhead
    scale = 1.0 / math.sqrt(hd)
    f32 = jnp.float32
    wdt = f32 if matmul_dtype is None else matmul_dtype

    def wt(w):
        return jnp.transpose(w).astype(wdt)

    return {
        "wq": wt(params["wq"] * scale), "wk": wt(params["wk"]), "wv": wt(params["wv"]),
        "bq": (params["bq"] * scale).astype(f32),
        "bk": params["bk"].astype(f32), "bv": params["bv"].astype(f32),
        "wo": wt(params["wo"]), "bo": params["bo"].astype(f32),
        "g1": params["g1"].astype(f32), "be1": params["be1"].astype(f32),
        "w1": wt(params["w1"]), "b1": params["b1"].astype(f32),
        "w2": wt(params["w2"]), "b2": params["b2"].astype(f32),
        "g2": params["g2"].astype(f32), "be2": params["be2"].astype(f32),
    }


def transformer_encoder_layer_bsd(src_bsd, pos_bsd, params, nhead, *,
                                  need_weights=False, block_b=None,
                                  matmul_dtype="auto"):
    """Batch-major entry point.  src_bsd, pos_bsd: (B, S, D).

    Returns (out_bsd, attn): out_bsd (B, S, D); attn (B, S, S) averaged over
    heads when need_weights=True, else None.  S should be a multiple of 8 so
    the in-kernel token flattening is layout preserving.
    """
    B, S, D = src_bsd.shape
    assert D % nhead == 0
    F = params["w1"].shape[0]

    gen = _tpu_generation()
    if matmul_dtype == "auto":
        # bf16 MXU operands on v6e/v7x (f32 accumulate): reaches the bf16 MXU
        # peak and halves weight DMA / VMEM residency.
        matmul_dtype = jnp.bfloat16 if gen in ("v6e", "v7x") else None
    matmul_bytes = 4 if matmul_dtype is None else jnp.dtype(matmul_dtype).itemsize

    prepared = _prepare_weights(params, nhead, matmul_dtype)
    weights = [prepared[name] for name in _PARAM_ORDER]
    weight_bytes = sum(int(w.size) * w.dtype.itemsize for w in weights)

    vmem_budget = _vmem_limit_bytes(gen)
    if block_b is None:
        block_b = _choose_block_b(B, S, D, F, need_weights, gen, weight_bytes,
                                  matmul_bytes, vmem_budget)
    assert B % block_b == 0, "block_b must divide the batch size"
    nb = B // block_b

    kernel = functools.partial(encoder_layer_kernel, nhead, matmul_dtype,
                               need_weights)

    act_spec = pl.BlockSpec((block_b, S, D), lambda b: (b, 0, 0))

    # Weights: constant index map -> each is fetched into VMEM once.
    # TODO(synk): use pipeline_mode=pl.Buffered(1) for truly single-buffered
    # resident weights once the installed Pallas build supports it.
    def w_spec(shape):
        nd = len(shape)
        return pl.BlockSpec(shape, lambda b, _nd=nd: (0,) * _nd)

    in_specs = [act_spec, act_spec] + [w_spec(w.shape) for w in weights]

    out_specs = [pl.BlockSpec((block_b, S, D), lambda b: (b, 0, 0))]
    out_shape = [jax.ShapeDtypeStruct((B, S, D), src_bsd.dtype)]
    if need_weights:
        # TODO(synk): for large S emit a lane-dense (block_b, S*S) layout (or
        # bf16) to avoid masked partial stores of the (S, S) tail.
        out_specs.append(pl.BlockSpec((block_b, S, S), lambda b: (b, 0, 0)))
        out_shape.append(jax.ShapeDtypeStruct((B, S, S), jnp.float32))

    ctx_dtype = jnp.float32 if matmul_dtype is None else matmul_dtype
    scratch_shapes = [pltpu.VMEM((block_b * S, D), ctx_dtype)]

    outs = pl.pallas_call(
        kernel,
        grid=(nb,),
        in_specs=in_specs,
        out_specs=out_specs,
        out_shape=out_shape,
        scratch_shapes=scratch_shapes,
        compiler_params=pltpu.CompilerParams(
            dimension_semantics=("parallel",),
            vmem_limit_bytes=vmem_budget),
    )(src_bsd, pos_bsd, *weights)

    out_bsd = outs[0]
    attn = outs[1] if need_weights else None
    return out_bsd, attn


def transformer_encoder_layer(src, pos, params, nhead, *, need_weights=True,
                              **kwargs):
    """Seq-first wrapper matching the PyTorch module: src, pos are (S, B, D).

    Callers that already hold batch-major activations should call
    `transformer_encoder_layer_bsd` directly and skip these two transposes.
    """
    out_bsd, attn = transformer_encoder_layer_bsd(
        jnp.transpose(src, (1, 0, 2)), jnp.transpose(pos, (1, 0, 2)),
        params, nhead, need_weights=need_weights, **kwargs)
    out = jnp.transpose(out_bsd, (1, 0, 2))
    return out, {"enc_tc_self_att": attn}


# ---------------------------------- main -------------------------------------

if __name__ == "__main__":
    S, B, D = 8, 2, 32
    NHEAD, FF = 4, 64

    key = jax.random.PRNGKey(0)
    k_src, k_pos, k_par = jax.random.split(key, 3)

    src = jax.random.normal(k_src, (S, B, D), jnp.float32)
    pos = jax.random.normal(k_pos, (S, B, D), jnp.float32)
    params = init_params(k_par, D, NHEAD, FF)

    # src_mask / src_key_padding_mask are None in this synthetic run.
    # TODO(synk): key_padding_mask support (additive -inf before softmax) not wired.
    out, att_values = transformer_encoder_layer(src, pos, params, NHEAD)
    out = jax.block_until_ready(out)
    attn = jax.block_until_ready(att_values["enc_tc_self_att"])

    assert out.shape == (S, B, D)
    assert attn.shape == (B, S, S)
    print("KERNEL_OK")
</pallas_src>

<mosaic_0001>
module attributes {stable_mosaic.version = 11 : i64} {
  func.func @encoder_layer_kernel(%arg0: i32, %arg1: memref<2x8x32xf32, #tpu.memory_space<vmem>>, %arg2: memref<2x8x32xf32, #tpu.memory_space<vmem>>, %arg3: memref<32x32xf32, #tpu.memory_space<vmem>>, %arg4: memref<32x32xf32, #tpu.memory_space<vmem>>, %arg5: memref<32x32xf32, #tpu.memory_space<vmem>>, %arg6: memref<1x32xf32, #tpu.memory_space<vmem>>, %arg7: memref<1x32xf32, #tpu.memory_space<vmem>>, %arg8: memref<1x32xf32, #tpu.memory_space<vmem>>, %arg9: memref<32x32xf32, #tpu.memory_space<vmem>>, %arg10: memref<1x32xf32, #tpu.memory_space<vmem>>, %arg11: memref<1x32xf32, #tpu.memory_space<vmem>>, %arg12: memref<1x32xf32, #tpu.memory_space<vmem>>, %arg13: memref<32x64xf32, #tpu.memory_space<vmem>>, %arg14: memref<1x64xf32, #tpu.memory_space<vmem>>, %arg15: memref<64x32xf32, #tpu.memory_space<vmem>>, %arg16: memref<1x32xf32, #tpu.memory_space<vmem>>, %arg17: memref<1x32xf32, #tpu.memory_space<vmem>>, %arg18: memref<1x32xf32, #tpu.memory_space<vmem>>, %arg19: memref<2x8x32xf32, #tpu.memory_space<vmem>>, %arg20: memref<2x8x8xf32, #tpu.memory_space<vmem>>, %arg21: memref<16x32xf32, #tpu.memory_space<vmem>>) attributes {dimension_semantics = [#tpu.dimension_semantics<parallel>], iteration_bounds = array<i64: 1>, scalar_prefetch = 0 : i64, scratch_operands = 1 : i64, tpu.core_type = #tpu.core_type<tc>, window_params = [{transform_indices = @transform_0, window_bounds = array<i64: 2, 8, 32>}, {transform_indices = @transform_1, window_bounds = array<i64: 2, 8, 32>}, {pipeline_mode = #tpu.pipeline_mode<synchronous>, transform_indices = @transform_2, window_bounds = array<i64: 32, 32>}, {pipeline_mode = #tpu.pipeline_mode<synchronous>, transform_indices = @transform_3, window_bounds = array<i64: 32, 32>}, {pipeline_mode = #tpu.pipeline_mode<synchronous>, transform_indices = @transform_4, window_bounds = array<i64: 32, 32>}, {pipeline_mode = #tpu.pipeline_mode<synchronous>, transform_indices = @transform_5, window_bounds = array<i64: 1, 32>}, {pipeline_mode = #tpu.pipeline_mode<synchronous>, transform_indices = @transform_6, window_bounds = array<i64: 1, 32>}, {pipeline_mode = #tpu.pipeline_mode<synchronous>, transform_indices = @transform_7, window_bounds = array<i64: 1, 32>}, {pipeline_mode = #tpu.pipeline_mode<synchronous>, transform_indices = @transform_8, window_bounds = array<i64: 32, 32>}, {pipeline_mode = #tpu.pipeline_mode<synchronous>, transform_indices = @transform_9, window_bounds = array<i64: 1, 32>}, {pipeline_mode = #tpu.pipeline_mode<synchronous>, transform_indices = @transform_10, window_bounds = array<i64: 1, 32>}, {pipeline_mode = #tpu.pipeline_mode<synchronous>, transform_indices = @transform_11, window_bounds = array<i64: 1, 32>}, {pipeline_mode = #tpu.pipeline_mode<synchronous>, transform_indices = @transform_12, window_bounds = array<i64: 32, 64>}, {pipeline_mode = #tpu.pipeline_mode<synchronous>, transform_indices = @transform_13, window_bounds = array<i64: 1, 64>}, {pipeline_mode = #tpu.pipeline_mode<synchronous>, transform_indices = @transform_14, window_bounds = array<i64: 64, 32>}, {pipeline_mode = #tpu.pipeline_mode<synchronous>, transform_indices = @transform_15, window_bounds = array<i64: 1, 32>}, {pipeline_mode = #tpu.pipeline_mode<synchronous>, transform_indices = @transform_16, window_bounds = array<i64: 1, 32>}, {pipeline_mode = #tpu.pipeline_mode<synchronous>, transform_indices = @transform_17, window_bounds = array<i64: 1, 32>}, {transform_indices = @transform_18, window_bounds = array<i64: 2, 8, 32>}, {transform_indices = @transform_19, window_bounds = array<i64: 2, 8, 8>}]} {
    %c0 = arith.constant 0 : index
    %c0_0 = arith.constant 0 : index
    %c0_1 = arith.constant 0 : index
    %0 = vector.load %arg1[%c0, %c0_0, %c0_1] : memref<2x8x32xf32, #tpu.memory_space<vmem>>, vector<2x8x32xf32>
    %c0_2 = arith.constant 0 : index
    %c0_3 = arith.constant 0 : index
    %c0_4 = arith.constant 0 : index
    %1 = vector.load %arg2[%c0_2, %c0_3, %c0_4] : memref<2x8x32xf32, #tpu.memory_space<vmem>>, vector<2x8x32xf32>
    %2 = arith.addf %0, %1 : vector<2x8x32xf32>
    %3 = vector.shape_cast %0 : vector<2x8x32xf32> to vector<16x32xf32>
    %4 = vector.shape_cast %2 : vector<2x8x32xf32> to vector<16x32xf32>
    %c0_5 = arith.constant 0 : index
    %c0_6 = arith.constant 0 : index
    %5 = vector.load %arg3[%c0_5, %c0_6] : memref<32x32xf32, #tpu.memory_space<vmem>>, vector<32x32xf32>
    %cst = arith.constant dense<0.000000e+00> : vector<16x32xf32>
    %6 = tpu.matmul %4, %5, %cst {dimension_numbers = #tpu.dot_dimension_numbers<[1], [0], [0], [1], [0, 0, 1, 1], [], []>} : vector<16x32xf32>, vector<32x32xf32>, vector<16x32xf32> -> vector<16x32xf32>
    %c0_7 = arith.constant 0 : index
    %c0_8 = arith.constant 0 : index
    %7 = vector.load %arg6[%c0_7, %c0_8] : memref<1x32xf32, #tpu.memory_space<vmem>>, vector<1x32xf32>
    %8 = vector.broadcast %7 : vector<1x32xf32> to vector<16x32xf32>
    %9 = arith.addf %6, %8 : vector<16x32xf32>
    %c0_9 = arith.constant 0 : index
    %c0_10 = arith.constant 0 : index
    %10 = vector.load %arg4[%c0_9, %c0_10] : memref<32x32xf32, #tpu.memory_space<vmem>>, vector<32x32xf32>
    %cst_11 = arith.constant dense<0.000000e+00> : vector<16x32xf32>
    %11 = tpu.matmul %4, %10, %cst_11 {dimension_numbers = #tpu.dot_dimension_numbers<[1], [0], [0], [1], [0, 0, 1, 1], [], []>} : vector<16x32xf32>, vector<32x32xf32>, vector<16x32xf32> -> vector<16x32xf32>
    %c0_12 = arith.constant 0 : index
    %c0_13 = arith.constant 0 : index
    %12 = vector.load %arg7[%c0_12, %c0_13] : memref<1x32xf32, #tpu.memory_space<vmem>>, vector<1x32xf32>
    %13 = vector.broadcast %12 : vector<1x32xf32> to vector<16x32xf32>
    %14 = arith.addf %11, %13 : vector<16x32xf32>
    %c0_14 = arith.constant 0 : index
    %c0_15 = arith.constant 0 : index
    %15 = vector.load %arg5[%c0_14, %c0_15] : memref<32x32xf32, #tpu.memory_space<vmem>>, vector<32x32xf32>
    %cst_16 = arith.constant dense<0.000000e+00> : vector<16x32xf32>
    %16 = tpu.matmul %3, %15, %cst_16 {dimension_numbers = #tpu.dot_dimension_numbers<[1], [0], [0], [1], [0, 0, 1, 1], [], []>} : vector<16x32xf32>, vector<32x32xf32>, vector<16x32xf32> -> vector<16x32xf32>
    %c0_17 = arith.constant 0 : index
    %c0_18 = arith.constant 0 : index
    %17 = vector.load %arg8[%c0_17, %c0_18] : memref<1x32xf32, #tpu.memory_space<vmem>>, vector<1x32xf32>
    %18 = vector.broadcast %17 : vector<1x32xf32> to vector<16x32xf32>
    %19 = arith.addf %16, %18 : vector<16x32xf32>
    %20 = vector.shape_cast %9 : vector<16x32xf32> to vector<2x8x32xf32>
    %21 = vector.shape_cast %14 : vector<16x32xf32> to vector<2x8x32xf32>
    %22 = vector.shape_cast %19 : vector<16x32xf32> to vector<2x8x32xf32>
    %23 = vector.extract_strided_slice %20 {offsets = [0, 0, 0], sizes = [2, 8, 8], strides = [1, 1, 1]} : vector<2x8x32xf32> to vector<2x8x8xf32>
    %24 = vector.extract_strided_slice %21 {offsets = [0, 0, 0], sizes = [2, 8, 8], strides = [1, 1, 1]} : vector<2x8x32xf32> to vector<2x8x8xf32>
    %25 = vector.extract_strided_slice %22 {offsets = [0, 0, 0], sizes = [2, 8, 8], strides = [1, 1, 1]} : vector<2x8x32xf32> to vector<2x8x8xf32>
    "tpu.trace_start"() <{level = 10 : i32, message = "bqd,bkd->bqk"}> : () -> ()
    %cst_19 = arith.constant dense<0.000000e+00> : vector<2x8x8xf32>
    %26 = tpu.matmul %23, %24, %cst_19 {dimension_numbers = #tpu.dot_dimension_numbers<[2], [2], [1], [1], [0, 0, 0, 1, 1, 1], [0], [0]>} : vector<2x8x8xf32>, vector<2x8x8xf32>, vector<2x8x8xf32> -> vector<2x8x8xf32>
    "tpu.trace_stop"() : () -> ()
    %cst_20 = arith.constant dense<0xFF800000> : vector<2x8xf32>
    %27 = vector.multi_reduction <maximumf>, %26, %cst_20 [2] : vector<2x8x8xf32> to vector<2x8xf32>
    %28 = vector.shape_cast %27 : vector<2x8xf32> to vector<2x8x1xf32>
    %29 = vector.broadcast %28 : vector<2x8x1xf32> to vector<2x8x8xf32>
    %30 = arith.subf %26, %29 : vector<2x8x8xf32>
    %31 = math.exp %30 : vector<2x8x8xf32>
    %cst_21 = arith.constant dense<0.000000e+00> : vector<2x8xf32>
    %32 = vector.multi_reduction <add>, %31, %cst_21 [2] : vector<2x8x8xf32> to vector<2x8xf32>
    %33 = vector.shape_cast %32 : vector<2x8xf32> to vector<2x8x1xf32>
    %34 = tpu.reciprocal %33 : vector<2x8x1xf32> -> vector<2x8x1xf32>
    %35 = vector.broadcast %34 : vector<2x8x1xf32> to vector<2x8x8xf32>
    %36 = arith.mulf %31, %35 : vector<2x8x8xf32>
    %cst_22 = arith.constant 2.500000e-01 : f32
    %37 = vector.broadcast %cst_22 : f32 to vector<2x8x8xf32>
    %38 = arith.mulf %36, %37 : vector<2x8x8xf32>
    %c0_23 = arith.constant 0 : index
    %c0_24 = arith.constant 0 : index
    %c0_25 = arith.constant 0 : index
    %39 = vector.load %arg20[%c0_23, %c0_24, %c0_25] : memref<2x8x8xf32, #tpu.memory_space<vmem>>, vector<2x8x8xf32>
    tpu.vector_store %arg20[%c0_23, %c0_24, %c0_25], %38 {strides = array<i32>} : memref<2x8x8xf32, #tpu.memory_space<vmem>>, vector<2x8x8xf32>,
    "tpu.trace_start"() <{level = 10 : i32, message = "bqk,bkd->bqd"}> : () -> ()
    %cst_26 = arith.constant dense<0.000000e+00> : vector<2x8x8xf32>
    %40 = tpu.matmul %36, %25, %cst_26 {dimension_numbers = #tpu.dot_dimension_numbers<[2], [1], [1], [2], [0, 0, 0, 1, 1, 2], [0], [0]>} : vector<2x8x8xf32>, vector<2x8x8xf32>, vector<2x8x8xf32> -> vector<2x8x8xf32>
    "tpu.trace_stop"() : () -> ()
    %41 = vector.shape_cast %40 : vector<2x8x8xf32> to vector<16x8xf32>
    %c0_27 = arith.constant 0 : index
    %c0_28 = arith.constant 0 : index
    %42 = vector.load %arg21[%c0_27, %c0_28] : memref<16x32xf32, #tpu.memory_space<vmem>>, vector<16x8xf32>
    tpu.vector_store %arg21[%c0_27, %c0_28], %41 {strides = array<i32>} : memref<16x32xf32, #tpu.memory_space<vmem>>, vector<16x8xf32>,
    %43 = vector.extract_strided_slice %20 {offsets = [0, 0, 8], sizes = [2, 8, 8], strides = [1, 1, 1]} : vector<2x8x32xf32> to vector<2x8x8xf32>
    %44 = vector.extract_strided_slice %21 {offsets = [0, 0, 8], sizes = [2, 8, 8], strides = [1, 1, 1]} : vector<2x8x32xf32> to vector<2x8x8xf32>
    %45 = vector.extract_strided_slice %22 {offsets = [0, 0, 8], sizes = [2, 8, 8], strides = [1, 1, 1]} : vector<2x8x32xf32> to vector<2x8x8xf32>
    "tpu.trace_start"() <{level = 10 : i32, message = "bqd,bkd->bqk"}> : () -> ()
    %cst_29 = arith.constant dense<0.000000e+00> : vector<2x8x8xf32>
    %46 = tpu.matmul %43, %44, %cst_29 {dimension_numbers = #tpu.dot_dimension_numbers<[2], [2], [1], [1], [0, 0, 0, 1, 1, 1], [0], [0]>} : vector<2x8x8xf32>, vector<2x8x8xf32>, vector<2x8x8xf32> -> vector<2x8x8xf32>
    "tpu.trace_stop"() : () -> ()
    %cst_30 = arith.constant dense<0xFF800000> : vector<2x8xf32>
    %47 = vector.multi_reduction <maximumf>, %46, %cst_30 [2] : vector<2x8x8xf32> to vector<2x8xf32>
    %48 = vector.shape_cast %47 : vector<2x8xf32> to vector<2x8x1xf32>
    %49 = vector.broadcast %48 : vector<2x8x1xf32> to vector<2x8x8xf32>
    %50 = arith.subf %46, %49 : vector<2x8x8xf32>
    %51 = math.exp %50 : vector<2x8x8xf32>
    %cst_31 = arith.constant dense<0.000000e+00> : vector<2x8xf32>
    %52 = vector.multi_reduction <add>, %51, %cst_31 [2] : vector<2x8x8xf32> to vector<2x8xf32>
    %53 = vector.shape_cast %52 : vector<2x8xf32> to vector<2x8x1xf32>
    %54 = tpu.reciprocal %53 : vector<2x8x1xf32> -> vector<2x8x1xf32>
    %55 = vector.broadcast %54 : vector<2x8x1xf32> to vector<2x8x8xf32>
    %56 = arith.mulf %51, %55 : vector<2x8x8xf32>
    %cst_32 = arith.constant 2.500000e-01 : f32
    %57 = vector.broadcast %cst_32 : f32 to vector<2x8x8xf32>
    %58 = arith.mulf %56, %57 : vector<2x8x8xf32>
    %c0_33 = arith.constant 0 : index
    %c0_34 = arith.constant 0 : index
    %c0_35 = arith.constant 0 : index
    %59 = vector.load %arg20[%c0_33, %c0_34, %c0_35] : memref<2x8x8xf32, #tpu.memory_space<vmem>>, vector<2x8x8xf32>
    %60 = arith.addf %59, %58 : vector<2x8x8xf32>
    %c0_36 = arith.constant 0 : index
    %c0_37 = arith.constant 0 : index
    %c0_38 = arith.constant 0 : index
    %61 = vector.load %arg20[%c0_36, %c0_37, %c0_38] : memref<2x8x8xf32, #tpu.memory_space<vmem>>, vector<2x8x8xf32>
    tpu.vector_store %arg20[%c0_36, %c0_37, %c0_38], %60 {strides = array<i32>} : memref<2x8x8xf32, #tpu.memory_space<vmem>>, vector<2x8x8xf32>,
    "tpu.trace_start"() <{level = 10 : i32, message = "bqk,bkd->bqd"}> : () -> ()
    %cst_39 = arith.constant dense<0.000000e+00> : vector<2x8x8xf32>
    %62 = tpu.matmul %56, %45, %cst_39 {dimension_numbers = #tpu.dot_dimension_numbers<[2], [1], [1], [2], [0, 0, 0, 1, 1, 2], [0], [0]>} : vector<2x8x8xf32>, vector<2x8x8xf32>, vector<2x8x8xf32> -> vector<2x8x8xf32>
    "tpu.trace_stop"() : () -> ()
    %63 = vector.shape_cast %62 : vector<2x8x8xf32> to vector<16x8xf32>
    %c0_40 = arith.constant 0 : index
    %c8 = arith.constant 8 : index
    %64 = vector.load %arg21[%c0_40, %c8] : memref<16x32xf32, #tpu.memory_space<vmem>>, vector<16x8xf32>
    tpu.vector_store %arg21[%c0_40, %c8], %63 {strides = array<i32>} : memref<16x32xf32, #tpu.memory_space<vmem>>, vector<16x8xf32>,
    %65 = vector.extract_strided_slice %20 {offsets = [0, 0, 16], sizes = [2, 8, 8], strides = [1, 1, 1]} : vector<2x8x32xf32> to vector<2x8x8xf32>
    %66 = vector.extract_strided_slice %21 {offsets = [0, 0, 16], sizes = [2, 8, 8], strides = [1, 1, 1]} : vector<2x8x32xf32> to vector<2x8x8xf32>
    %67 = vector.extract_strided_slice %22 {offsets = [0, 0, 16], sizes = [2, 8, 8], strides = [1, 1, 1]} : vector<2x8x32xf32> to vector<2x8x8xf32>
    "tpu.trace_start"() <{level = 10 : i32, message = "bqd,bkd->bqk"}> : () -> ()
    %cst_41 = arith.constant dense<0.000000e+00> : vector<2x8x8xf32>
    %68 = tpu.matmul %65, %66, %cst_41 {dimension_numbers = #tpu.dot_dimension_numbers<[2], [2], [1], [1], [0, 0, 0, 1, 1, 1], [0], [0]>} : vector<2x8x8xf32>, vector<2x8x8xf32>, vector<2x8x8xf32> -> vector<2x8x8xf32>
    "tpu.trace_stop"() : () -> ()
    %cst_42 = arith.constant dense<0xFF800000> : vector<2x8xf32>
    %69 = vector.multi_reduction <maximumf>, %68, %cst_42 [2] : vector<2x8x8xf32> to vector<2x8xf32>
    %70 = vector.shape_cast %69 : vector<2x8xf32> to vector<2x8x1xf32>
    %71 = vector.broadcast %70 : vector<2x8x1xf32> to vector<2x8x8xf32>
    %72 = arith.subf %68, %71 : vector<2x8x8xf32>
    %73 = math.exp %72 : vector<2x8x8xf32>
    %cst_43 = arith.constant dense<0.000000e+00> : vector<2x8xf32>
    %74 = vector.multi_reduction <add>, %73, %cst_43 [2] : vector<2x8x8xf32> to vector<2x8xf32>
    %75 = vector.shape_cast %74 : vector<2x8xf32> to vector<2x8x1xf32>
    %76 = tpu.reciprocal %75 : vector<2x8x1xf32> -> vector<2x8x1xf32>
    %77 = vector.broadcast %76 : vector<2x8x1xf32> to vector<2x8x8xf32>
    %78 = arith.mulf %73, %77 : vector<2x8x8xf32>
    %cst_44 = arith.constant 2.500000e-01 : f32
    %79 = vector.broadcast %cst_44 : f32 to vector<2x8x8xf32>
    %80 = arith.mulf %78, %79 : vector<2x8x8xf32>
    %c0_45 = arith.constant 0 : index
    %c0_46 = arith.constant 0 : index
    %c0_47 = arith.constant 0 : index
    %81 = vector.load %arg20[%c0_45, %c0_46, %c0_47] : memref<2x8x8xf32, #tpu.memory_space<vmem>>, vector<2x8x8xf32>
    %82 = arith.addf %81, %80 : vector<2x8x8xf32>
    %c0_48 = arith.constant 0 : index
    %c0_49 = arith.constant 0 : index
    %c0_50 = arith.constant 0 : index
    %83 = vector.load %arg20[%c0_48, %c0_49, %c0_50] : memref<2x8x8xf32, #tpu.memory_space<vmem>>, vector<2x8x8xf32>
    tpu.vector_store %arg20[%c0_48, %c0_49, %c0_50], %82 {strides = array<i32>} : memref<2x8x8xf32, #tpu.memory_space<vmem>>, vector<2x8x8xf32>,
    "tpu.trace_start"() <{level = 10 : i32, message = "bqk,bkd->bqd"}> : () -> ()
    %cst_51 = arith.constant dense<0.000000e+00> : vector<2x8x8xf32>
    %84 = tpu.matmul %78, %67, %cst_51 {dimension_numbers = #tpu.dot_dimension_numbers<[2], [1], [1], [2], [0, 0, 0, 1, 1, 2], [0], [0]>} : vector<2x8x8xf32>, vector<2x8x8xf32>, vector<2x8x8xf32> -> vector<2x8x8xf32>
    "tpu.trace_stop"() : () -> ()
    %85 = vector.shape_cast %84 : vector<2x8x8xf32> to vector<16x8xf32>
    %c0_52 = arith.constant 0 : index
    %c16 = arith.constant 16 : index
    %86 = vector.load %arg21[%c0_52, %c16] : memref<16x32xf32, #tpu.memory_space<vmem>>, vector<16x8xf32>
    tpu.vector_store %arg21[%c0_52, %c16], %85 {strides = array<i32>} : memref<16x32xf32, #tpu.memory_space<vmem>>, vector<16x8xf32>,
    %87 = vector.extract_strided_slice %20 {offsets = [0, 0, 24], sizes = [2, 8, 8], strides = [1, 1, 1]} : vector<2x8x32xf32> to vector<2x8x8xf32>
    %88 = vector.extract_strided_slice %21 {offsets = [0, 0, 24], sizes = [2, 8, 8], strides = [1, 1, 1]} : vector<2x8x32xf32> to vector<2x8x8xf32>
    %89 = vector.extract_strided_slice %22 {offsets = [0, 0, 24], sizes = [2, 8, 8], strides = [1, 1, 1]} : vector<2x8x32xf32> to vector<2x8x8xf32>
    "tpu.trace_start"() <{level = 10 : i32, message = "bqd,bkd->bqk"}> : () -> ()
    %cst_53 = arith.constant dense<0.000000e+00> : vector<2x8x8xf32>
    %90 = tpu.matmul %87, %88, %cst_53 {dimension_numbers = #tpu.dot_dimension_numbers<[2], [2], [1], [1], [0, 0, 0, 1, 1, 1], [0], [0]>} : vector<2x8x8xf32>, vector<2x8x8xf32>, vector<2x8x8xf32> -> vector<2x8x8xf32>
    "tpu.trace_stop"() : () -> ()
    %cst_54 = arith.constant dense<0xFF800000> : vector<2x8xf32>
    %91 = vector.multi_reduction <maximumf>, %90, %cst_54 [2] : vector<2x8x8xf32> to vector<2x8xf32>
    %92 = vector.shape_cast %91 : vector<2x8xf32> to vector<2x8x1xf32>
    %93 = vector.broadcast %92 : vector<2x8x1xf32> to vector<2x8x8xf32>
    %94 = arith.subf %90, %93 : vector<2x8x8xf32>
    %95 = math.exp %94 : vector<2x8x8xf32>
    %cst_55 = arith.constant dense<0.000000e+00> : vector<2x8xf32>
    %96 = vector.multi_reduction <add>, %95, %cst_55 [2] : vector<2x8x8xf32> to vector<2x8xf32>
    %97 = vector.shape_cast %96 : vector<2x8xf32> to vector<2x8x1xf32>
    %98 = tpu.reciprocal %97 : vector<2x8x1xf32> -> vector<2x8x1xf32>
    %99 = vector.broadcast %98 : vector<2x8x1xf32> to vector<2x8x8xf32>
    %100 = arith.mulf %95, %99 : vector<2x8x8xf32>
    %cst_56 = arith.constant 2.500000e-01 : f32
    %101 = vector.broadcast %cst_56 : f32 to vector<2x8x8xf32>
    %102 = arith.mulf %100, %101 : vector<2x8x8xf32>
    %c0_57 = arith.constant 0 : index
    %c0_58 = arith.constant 0 : index
    %c0_59 = arith.constant 0 : index
    %103 = vector.load %arg20[%c0_57, %c0_58, %c0_59] : memref<2x8x8xf32, #tpu.memory_space<vmem>>, vector<2x8x8xf32>
    %104 = arith.addf %103, %102 : vector<2x8x8xf32>
    %c0_60 = arith.constant 0 : index
    %c0_61 = arith.constant 0 : index
    %c0_62 = arith.constant 0 : index
    %105 = vector.load %arg20[%c0_60, %c0_61, %c0_62] : memref<2x8x8xf32, #tpu.memory_space<vmem>>, vector<2x8x8xf32>
    tpu.vector_store %arg20[%c0_60, %c0_61, %c0_62], %104 {strides = array<i32>} : memref<2x8x8xf32, #tpu.memory_space<vmem>>, vector<2x8x8xf32>,
    "tpu.trace_start"() <{level = 10 : i32, message = "bqk,bkd->bqd"}> : () -> ()
    %cst_63 = arith.constant dense<0.000000e+00> : vector<2x8x8xf32>
    %106 = tpu.matmul %100, %89, %cst_63 {dimension_numbers = #tpu.dot_dimension_numbers<[2], [1], [1], [2], [0, 0, 0, 1, 1, 2], [0], [0]>} : vector<2x8x8xf32>, vector<2x8x8xf32>, vector<2x8x8xf32> -> vector<2x8x8xf32>
    "tpu.trace_stop"() : () -> ()
    %107 = vector.shape_cast %106 : vector<2x8x8xf32> to vector<16x8xf32>
    %c0_64 = arith.constant 0 : index
    %c24 = arith.constant 24 : index
    %108 = vector.load %arg21[%c0_64, %c24] : memref<16x32xf32, #tpu.memory_space<vmem>>, vector<16x8xf32>
    tpu.vector_store %arg21[%c0_64, %c24], %107 {strides = array<i32>} : memref<16x32xf32, #tpu.memory_space<vmem>>, vector<16x8xf32>,
    %c0_65 = arith.constant 0 : index
    %c0_66 = arith.constant 0 : index
    %109 = vector.load %arg21[%c0_65, %c0_66] : memref<16x32xf32, #tpu.memory_space<vmem>>, vector<16x32xf32>
    %c0_67 = arith.constant 0 : index
    %c0_68 = arith.constant 0 : index
    %110 = vector.load %arg9[%c0_67, %c0_68] : memref<32x32xf32, #tpu.memory_space<vmem>>, vector<32x32xf32>
    %cst_69 = arith.constant dense<0.000000e+00> : vector<16x32xf32>
    %111 = tpu.matmul %109, %110, %cst_69 {dimension_numbers = #tpu.dot_dimension_numbers<[1], [0], [0], [1], [0, 0, 1, 1], [], []>} : vector<16x32xf32>, vector<32x32xf32>, vector<16x32xf32> -> vector<16x32xf32>
    %c0_70 = arith.constant 0 : index
    %c0_71 = arith.constant 0 : index
    %112 = vector.load %arg10[%c0_70, %c0_71] : memref<1x32xf32, #tpu.memory_space<vmem>>, vector<1x32xf32>
    %113 = vector.broadcast %112 : vector<1x32xf32> to vector<16x32xf32>
    %114 = arith.addf %111, %113 : vector<16x32xf32>
    %115 = arith.addf %3, %114 : vector<16x32xf32>
    %c0_72 = arith.constant 0 : index
    %c0_73 = arith.constant 0 : index
    %116 = vector.load %arg11[%c0_72, %c0_73] : memref<1x32xf32, #tpu.memory_space<vmem>>, vector<1x32xf32>
    %c0_74 = arith.constant 0 : index
    %c0_75 = arith.constant 0 : index
    %117 = vector.load %arg12[%c0_74, %c0_75] : memref<1x32xf32, #tpu.memory_space<vmem>>, vector<1x32xf32>
    %cst_76 = arith.constant dense<0.000000e+00> : vector<16xf32>
    %118 = vector.multi_reduction <add>, %115, %cst_76 [1] : vector<16x32xf32> to vector<16xf32>
    %119 = vector.shape_cast %118 : vector<16xf32> to vector<16x1xf32>
    %cst_77 = arith.constant 3.200000e+01 : f32
    %120 = vector.broadcast %cst_77 : f32 to vector<16x1xf32>
    %121 = arith.divf %119, %120 : vector<16x1xf32>
    %122 = vector.broadcast %121 : vector<16x1xf32> to vector<16x32xf32>
    %123 = arith.subf %115, %122 : vector<16x32xf32>
    %124 = arith.mulf %123, %123 : vector<16x32xf32>
    %cst_78 = arith.constant dense<0.000000e+00> : vector<16xf32>
    %125 = vector.multi_reduction <add>, %124, %cst_78 [1] : vector<16x32xf32> to vector<16xf32>
    %126 = vector.shape_cast %125 : vector<16xf32> to vector<16x1xf32>
    %cst_79 = arith.constant 3.200000e+01 : f32
    %127 = vector.broadcast %cst_79 : f32 to vector<16x1xf32>
    %128 = arith.divf %126, %127 : vector<16x1xf32>
    %cst_80 = arith.constant 9.99999974E-6 : f32
    %129 = vector.broadcast %cst_80 : f32 to vector<16x1xf32>
    %130 = arith.addf %128, %129 : vector<16x1xf32>
    %131 = math.rsqrt %130 : vector<16x1xf32>
    %132 = vector.broadcast %131 : vector<16x1xf32> to vector<16x32xf32>
    %133 = arith.mulf %123, %132 : vector<16x32xf32>
    %134 = vector.broadcast %116 : vector<1x32xf32> to vector<16x32xf32>
    %135 = arith.mulf %133, %134 : vector<16x32xf32>
    %136 = vector.broadcast %117 : vector<1x32xf32> to vector<16x32xf32>
    %137 = arith.addf %135, %136 : vector<16x32xf32>
    %c0_81 = arith.constant 0 : index
    %c0_82 = arith.constant 0 : index
    %138 = vector.load %arg13[%c0_81, %c0_82] : memref<32x64xf32, #tpu.memory_space<vmem>>, vector<32x64xf32>
    %cst_83 = arith.constant dense<0.000000e+00> : vector<16x64xf32>
    %139 = tpu.matmul %137, %138, %cst_83 {dimension_numbers = #tpu.dot_dimension_numbers<[1], [0], [0], [1], [0, 0, 1, 1], [], []>} : vector<16x32xf32>, vector<32x64xf32>, vector<16x64xf32> -> vector<16x64xf32>
    %c0_84 = arith.constant 0 : index
    %c0_85 = arith.constant 0 : index
    %140 = vector.load %arg14[%c0_84, %c0_85] : memref<1x64xf32, #tpu.memory_space<vmem>>, vector<1x64xf32>
    %141 = vector.broadcast %140 : vector<1x64xf32> to vector<16x64xf32>
    %142 = arith.addf %139, %141 : vector<16x64xf32>
    %cst_86 = arith.constant 0.000000e+00 : f32
    %143 = vector.broadcast %cst_86 : f32 to vector<16x64xf32>
    %144 = arith.maximumf %142, %143 : vector<16x64xf32>
    %c0_87 = arith.constant 0 : index
    %c0_88 = arith.constant 0 : index
    %145 = vector.load %arg15[%c0_87, %c0_88] : memref<64x32xf32, #tpu.memory_space<vmem>>, vector<64x32xf32>
    %cst_89 = arith.constant dense<0.000000e+00> : vector<16x32xf32>
    %146 = tpu.matmul %144, %145, %cst_89 {dimension_numbers = #tpu.dot_dimension_numbers<[1], [0], [0], [1], [0, 0, 1, 1], [], []>} : vector<16x64xf32>, vector<64x32xf32>, vector<16x32xf32> -> vector<16x32xf32>
    %c0_90 = arith.constant 0 : index
    %c0_91 = arith.constant 0 : index
    %147 = vector.load %arg16[%c0_90, %c0_91] : memref<1x32xf32, #tpu.memory_space<vmem>>, vector<1x32xf32>
    %148 = vector.broadcast %147 : vector<1x32xf32> to vector<16x32xf32>
    %149 = arith.addf %146, %148 : vector<16x32xf32>
    %150 = arith.addf %137, %149 : vector<16x32xf32>
    %c0_92 = arith.constant 0 : index
    %c0_93 = arith.constant 0 : index
    %151 = vector.load %arg17[%c0_92, %c0_93] : memref<1x32xf32, #tpu.memory_space<vmem>>, vector<1x32xf32>
    %c0_94 = arith.constant 0 : index
    %c0_95 = arith.constant 0 : index
    %152 = vector.load %arg18[%c0_94, %c0_95] : memref<1x32xf32, #tpu.memory_space<vmem>>, vector<1x32xf32>
    %cst_96 = arith.constant dense<0.000000e+00> : vector<16xf32>
    %153 = vector.multi_reduction <add>, %150, %cst_96 [1] : vector<16x32xf32> to vector<16xf32>
    %154 = vector.shape_cast %153 : vector<16xf32> to vector<16x1xf32>
    %cst_97 = arith.constant 3.200000e+01 : f32
    %155 = vector.broadcast %cst_97 : f32 to vector<16x1xf32>
    %156 = arith.divf %154, %155 : vector<16x1xf32>
    %157 = vector.broadcast %156 : vector<16x1xf32> to vector<16x32xf32>
    %158 = arith.subf %150, %157 : vector<16x32xf32>
    %159 = arith.mulf %158, %158 : vector<16x32xf32>
    %cst_98 = arith.constant dense<0.000000e+00> : vector<16xf32>
    %160 = vector.multi_reduction <add>, %159, %cst_98 [1] : vector<16x32xf32> to vector<16xf32>
    %161 = vector.shape_cast %160 : vector<16xf32> to vector<16x1xf32>
    %cst_99 = arith.constant 3.200000e+01 : f32
    %162 = vector.broadcast %cst_99 : f32 to vector<16x1xf32>
    %163 = arith.divf %161, %162 : vector<16x1xf32>
    %cst_100 = arith.constant 9.99999974E-6 : f32
    %164 = vector.broadcast %cst_100 : f32 to vector<16x1xf32>
    %165 = arith.addf %163, %164 : vector<16x1xf32>
    %166 = math.rsqrt %165 : vector<16x1xf32>
    %167 = vector.broadcast %166 : vector<16x1xf32> to vector<16x32xf32>
    %168 = arith.mulf %158, %167 : vector<16x32xf32>
    %169 = vector.broadcast %151 : vector<1x32xf32> to vector<16x32xf32>
    %170 = arith.mulf %168, %169 : vector<16x32xf32>
    %171 = vector.broadcast %152 : vector<1x32xf32> to vector<16x32xf32>
    %172 = arith.addf %170, %171 : vector<16x32xf32>
    %173 = vector.shape_cast %172 : vector<16x32xf32> to vector<2x8x32xf32>
    %c0_101 = arith.constant 0 : index
    %c0_102 = arith.constant 0 : index
    %c0_103 = arith.constant 0 : index
    %174 = vector.load %arg19[%c0_101, %c0_102, %c0_103] : memref<2x8x32xf32, #tpu.memory_space<vmem>>, vector<2x8x32xf32>
    tpu.vector_store %arg19[%c0_101, %c0_102, %c0_103], %173 {strides = array<i32>} : memref<2x8x32xf32, #tpu.memory_space<vmem>>, vector<2x8x32xf32>,
    return
  }
  func.func @transform_0(%arg0: i32) -> (i32, i32, i32) {
    %c0_i32 = arith.constant 0 : i32
    %c0_i32_0 = arith.constant 0 : i32
    %c0_i32_1 = arith.constant 0 : i32
    return %arg0, %c0_i32, %c0_i32_0 : i32, i32, i32
  }
  func.func @transform_1(%arg0: i32) -> (i32, i32, i32) {
    %c0_i32 = arith.constant 0 : i32
    %c0_i32_0 = arith.constant 0 : i32
    %c0_i32_1 = arith.constant 0 : i32
    return %arg0, %c0_i32, %c0_i32_0 : i32, i32, i32
  }
  func.func @transform_2(%arg0: i32) -> (i32, i32) {
    %c0_i32 = arith.constant 0 : i32
    %c0_i32_0 = arith.constant 0 : i32
    %c0_i32_1 = arith.constant 0 : i32
    return %c0_i32, %c0_i32_0 : i32, i32
  }
  func.func @transform_3(%arg0: i32) -> (i32, i32) {
    %c0_i32 = arith.constant 0 : i32
    %c0_i32_0 = arith.constant 0 : i32
    %c0_i32_1 = arith.constant 0 : i32
    return %c0_i32, %c0_i32_0 : i32, i32
  }
  func.func @transform_4(%arg0: i32) -> (i32, i32) {
    %c0_i32 = arith.constant 0 : i32
    %c0_i32_0 = arith.constant 0 : i32
    %c0_i32_1 = arith.constant 0 : i32
    return %c0_i32, %c0_i32_0 : i32, i32
  }
  func.func @transform_5(%arg0: i32) -> (i32, i32) {
    %c0_i32 = arith.constant 0 : i32
    %c0_i32_0 = arith.constant 0 : i32
    %c0_i32_1 = arith.constant 0 : i32
    return %c0_i32, %c0_i32_0 : i32, i32
  }
  func.func @transform_6(%arg0: i32) -> (i32, i32) {
    %c0_i32 = arith.constant 0 : i32
    %c0_i32_0 = arith.constant 0 : i32
    %c0_i32_1 = arith.constant 0 : i32
    return %c0_i32, %c0_i32_0 : i32, i32
  }
  func.func @transform_7(%arg0: i32) -> (i32, i32) {
    %c0_i32 = arith.constant 0 : i32
    %c0_i32_0 = arith.constant 0 : i32
    %c0_i32_1 = arith.constant 0 : i32
    return %c0_i32, %c0_i32_0 : i32, i32
  }
  func.func @transform_8(%arg0: i32) -> (i32, i32) {
    %c0_i32 = arith.constant 0 : i32
    %c0_i32_0 = arith.constant 0 : i32
    %c0_i32_1 = arith.constant 0 : i32
    return %c0_i32, %c0_i32_0 : i32, i32
  }
  func.func @transform_9(%arg0: i32) -> (i32, i32) {
    %c0_i32 = arith.constant 0 : i32
    %c0_i32_0 = arith.constant 0 : i32
    %c0_i32_1 = arith.constant 0 : i32
    return %c0_i32, %c0_i32_0 : i32, i32
  }
  func.func @transform_10(%arg0: i32) -> (i32, i32) {
    %c0_i32 = arith.constant 0 : i32
    %c0_i32_0 = arith.constant 0 : i32
    %c0_i32_1 = arith.constant 0 : i32
    return %c0_i32, %c0_i32_0 : i32, i32
  }
  func.func @transform_11(%arg0: i32) -> (i32, i32) {
    %c0_i32 = arith.constant 0 : i32
    %c0_i32_0 = arith.constant 0 : i32
    %c0_i32_1 = arith.constant 0 : i32
    return %c0_i32, %c0_i32_0 : i32, i32
  }
  func.func @transform_12(%arg0: i32) -> (i32, i32) {
    %c0_i32 = arith.constant 0 : i32
    %c0_i32_0 = arith.constant 0 : i32
    %c0_i32_1 = arith.constant 0 : i32
    return %c0_i32, %c0_i32_0 : i32, i32
  }
  func.func @transform_13(%arg0: i32) -> (i32, i32) {
    %c0_i32 = arith.constant 0 : i32
    %c0_i32_0 = arith.constant 0 : i32
    %c0_i32_1 = arith.constant 0 : i32
    return %c0_i32, %c0_i32_0 : i32, i32
  }
  func.func @transform_14(%arg0: i32) -> (i32, i32) {
    %c0_i32 = arith.constant 0 : i32
    %c0_i32_0 = arith.constant 0 : i32
    %c0_i32_1 = arith.constant 0 : i32
    return %c0_i32, %c0_i32_0 : i32, i32
  }
  func.func @transform_15(%arg0: i32) -> (i32, i32) {
    %c0_i32 = arith.constant 0 : i32
    %c0_i32_0 = arith.constant 0 : i32
    %c0_i32_1 = arith.constant 0 : i32
    return %c0_i32, %c0_i32_0 : i32, i32
  }
  func.func @transform_16(%arg0: i32) -> (i32, i32) {
    %c0_i32 = arith.constant 0 : i32
    %c0_i32_0 = arith.constant 0 : i32
    %c0_i32_1 = arith.constant 0 : i32
    return %c0_i32, %c0_i32_0 : i32, i32
  }
  func.func @transform_17(%arg0: i32) -> (i32, i32) {
    %c0_i32 = arith.constant 0 : i32
    %c0_i32_0 = arith.constant 0 : i32
    %c0_i32_1 = arith.constant 0 : i32
    return %c0_i32, %c0_i32_0 : i32, i32
  }
  func.func @transform_18(%arg0: i32) -> (i32, i32, i32) {
    %c0_i32 = arith.constant 0 : i32
    %c0_i32_0 = arith.constant 0 : i32
    %c0_i32_1 = arith.constant 0 : i32
    return %arg0, %c0_i32, %c0_i32_0 : i32, i32, i32
  }
  func.func @transform_19(%arg0: i32) -> (i32, i32, i32) {
    %c0_i32 = arith.constant 0 : i32
    %c0_i32_0 = arith.constant 0 : i32
    %c0_i32_1 = arith.constant 0 : i32
    return %arg0, %c0_i32, %c0_i32_0 : i32, i32, i32
  }
}

</mosaic_0001>

<llo_original>
// kernel: tpu_custom_call.1
$region0: #{tpu_custom_call.1}
  #allocation0 [shape = 'u32[]', space=smem, size = 0x4, offset = 0x4, fixed_abs, tag = 'smem constant byte address 0x4 - core index']
  #allocation1 [shape = 'u32[72,128]{1,0:T(1,128)}', space=vmem, size = 0x9000, scoped, tag = 'internal scratch']
  #allocation2 [shape = 'f32[16,32]{1,0:T(8,128)}', space=vmem, size = 0x2000, scoped, tag = 'scratch operand']
  %s0 = inlined_call_operand.hbm [shape: f32[2,8,32], index: 0, kind: input, shape index: {}]
  %s1 = inlined_call_operand.hbm [shape: f32[2,8,32], index: 1, kind: input, shape index: {}]
  %s2 = inlined_call_operand.vmem [shape: f32[32,32], index: 2, kind: input, shape index: {}]
  %s3 = inlined_call_operand.vmem [shape: f32[32,32], index: 3, kind: input, shape index: {}]
  %s4 = inlined_call_operand.vmem [shape: f32[32,32], index: 4, kind: input, shape index: {}]
  %s5 = inlined_call_operand.vmem [shape: f32[1,32], index: 5, kind: input, shape index: {}]
  %s6 = inlined_call_operand.vmem [shape: f32[1,32], index: 6, kind: input, shape index: {}]
  %s7 = inlined_call_operand.vmem [shape: f32[1,32], index: 7, kind: input, shape index: {}]
  %s8 = inlined_call_operand.hbm [shape: f32[32,32], index: 8, kind: input, shape index: {}]
  %s9 = inlined_call_operand.vmem [shape: f32[1,32], index: 9, kind: input, shape index: {}]
  %s10 = inlined_call_operand.vmem [shape: f32[1,32], index: 10, kind: input, shape index: {}]
  %s11 = inlined_call_operand.vmem [shape: f32[1,32], index: 11, kind: input, shape index: {}]
  %s12 = inlined_call_operand.hbm [shape: f32[32,64], index: 12, kind: input, shape index: {}]
  %s13 = inlined_call_operand.vmem [shape: f32[1,64], index: 13, kind: input, shape index: {}]
  %s14 = inlined_call_operand.vmem [shape: f32[64,32], index: 14, kind: input, shape index: {}]
  %s15 = inlined_call_operand.vmem [shape: f32[1,32], index: 15, kind: input, shape index: {}]
  %s16 = inlined_call_operand.vmem [shape: f32[1,32], index: 16, kind: input, shape index: {}]
  %s17 = inlined_call_operand.vmem [shape: f32[1,32], index: 17, kind: input, shape index: {}]
  %s18 = inlined_call_operand.hbm [shape: f32[2,8,32], index: 18, kind: output, shape index: {0}]
  %s19 = inlined_call_operand.hbm [shape: f32[2,8,8], index: 19, kind: output, shape index: {1}]
  %20 = xla_tuple %s18, %s19
  %s21 = sld [smem:[#allocation0]]
  $region106: #{tpu_custom_call.1} parent=0
    _
  %s23 = ssub.s32 1, %s21
  %s24 = scalar_select 0, %s23, %s21
  $region1: #{tpu_custom_call.1} parent=0
    #allocation3 [shape = 'u8[8192]{0}', space=vmem, size = 0x2000, scoped, tag = 'input window, operand 0, single buffered']
    #allocation4 [shape = 's32[1]{0}', space=sflag, size = 0x4, scoped, tag = 'scoped memory for tpu_custom_call.1']
    #allocation5 [shape = 's32[1]{0}', space=sflag, size = 0x4, scoped, tag = 'scoped memory for tpu_custom_call.1']
    #allocation6 [shape = 'u8[8192]{0}', space=vmem, size = 0x2000, scoped, tag = 'input window, operand 1, single buffered']
    #allocation7 [shape = 's32[1]{0}', space=sflag, size = 0x4, scoped, tag = 'scoped memory for tpu_custom_call.1']
    #allocation8 [shape = 'u8[16384]{0}', space=vmem, size = 0x4000, scoped, tag = 'input window, operand 8, single buffered']
    #allocation9 [shape = 'u8[16384]{0}', space=vmem, size = 0x4000, scoped, tag = 'input window, operand 12, single buffered']
    #allocation10 [shape = 's32[1]{0}', space=sflag, size = 0x4, scoped, tag = 'scoped memory for tpu_custom_call.1']
    #allocation11 [shape = 'u8[8192]{0}', space=vmem, size = 0x2000, scoped, tag = 'output window, operand 0, single buffered']
    #allocation12 [shape = 'u8[8192]{0}', space=vmem, size = 0x2000, scoped, tag = 'output window, operand 1, single buffered']
    #allocation13 [shape = 's32[1]{0}', space=sflag, size = 0x4, scoped, tag = 'scoped memory for tpu_custom_call.1']
    %25 = vsyncpa [#allocation4], 0
    %26 = vsyncpa [#allocation7], 0
    %27 = vsyncpa [#allocation10], 0
    %28 = vsyncpa [#allocation5], 0
    %29 = vsyncpa [#allocation13], 0
    // Predicated region
    $region2: #{tpu_custom_call.1} parent=1 // pred_check
      _
    $region3: #{tpu_custom_call.1} parent=1 // pred_check_branch
      %31 = sbr.rel (0) target = $region5
    $region4: #{tpu_custom_call.1} parent=1 // pred_region
      %33 = vsyncadd [#allocation4], 0
      %s34 = sshll.u32 %s0, 4
      %s35 = int_to_ptr.hbm [resolvable:$true] %s34
      %s36 = sshll.u32 [#allocation3], 4
      %s37 = int_to_ptr.vmem [resolvable:$true] %s36
      %42 = dma.hbm_to_vmem [thread:$0]  %s35, 256, %s37, [#allocation4], 128, 128, 8
    $region5: #{tpu_custom_call.1} parent=1 // pred_fallthru
      _
    // Predicated region
    $region6: #{tpu_custom_call.1} parent=1 // pred_check
      _
    $region7: #{tpu_custom_call.1} parent=1 // pred_check_branch
      %44 = sbr.rel (0) target = $region9
    $region8: #{tpu_custom_call.1} parent=1 // pred_region
      %46 = vsyncadd [#allocation7], 0
      %s47 = sshll.u32 %s1, 4
      %s48 = int_to_ptr.hbm [resolvable:$true] %s47
      %s49 = sshll.u32 [#allocation6], 4
      %s50 = int_to_ptr.vmem [resolvable:$true] %s49
      %55 = dma.hbm_to_vmem [thread:$0]  %s48, 256, %s50, [#allocation7], 128, 128, 8
    $region9: #{tpu_custom_call.1} parent=1 // pred_fallthru
      _
    // Predicated region
    $region10: #{tpu_custom_call.1} parent=1 // pred_check
      _
    $region11: #{tpu_custom_call.1} parent=1 // pred_check_branch
      %57 = sbr.rel (0) target = $region13
    $region12: #{tpu_custom_call.1} parent=1 // pred_region
      _
    $region13: #{tpu_custom_call.1} parent=1 // pred_fallthru
      _
    // Predicated region
    $region14: #{tpu_custom_call.1} parent=1 // pred_check
      _
    $region15: #{tpu_custom_call.1} parent=1 // pred_check_branch
      %59 = sbr.rel (0) target = $region17
    $region16: #{tpu_custom_call.1} parent=1 // pred_region
      _
    $region17: #{tpu_custom_call.1} parent=1 // pred_fallthru
      _
    // Predicated region
    $region18: #{tpu_custom_call.1} parent=1 // pred_check
      _
    $region19: #{tpu_custom_call.1} parent=1 // pred_check_branch
      %61 = sbr.rel (0) target = $region21
    $region20: #{tpu_custom_call.1} parent=1 // pred_region
      _
    $region21: #{tpu_custom_call.1} parent=1 // pred_fallthru
      _
    // Predicated region
    $region22: #{tpu_custom_call.1} parent=1 // pred_check
      _
    $region23: #{tpu_custom_call.1} parent=1 // pred_check_branch
      %63 = sbr.rel (0) target = $region25
    $region24: #{tpu_custom_call.1} parent=1 // pred_region
      _
    $region25: #{tpu_custom_call.1} parent=1 // pred_fallthru
      _
    // Predicated region
    $region26: #{tpu_custom_call.1} parent=1 // pred_check
      _
    $region27: #{tpu_custom_call.1} parent=1 // pred_check_branch
      %65 = sbr.rel (0) target = $region29
    $region28: #{tpu_custom_call.1} parent=1 // pred_region
      _
    $region29: #{tpu_custom_call.1} parent=1 // pred_fallthru
      _
    // Predicated region
    $region30: #{tpu_custom_call.1} parent=1 // pred_check
      _
    $region31: #{tpu_custom_call.1} parent=1 // pred_check_branch
      %67 = sbr.rel (0) target = $region33
    $region32: #{tpu_custom_call.1} parent=1 // pred_region
      _
    $region33: #{tpu_custom_call.1} parent=1 // pred_fallthru
      _
    // Predicated region
    $region34: #{tpu_custom_call.1} parent=1 // pred_check
      _
    $region35: #{tpu_custom_call.1} parent=1 // pred_check_branch
      %69 = sbr.rel (0) target = $region37
    $region36: #{tpu_custom_call.1} parent=1 // pred_region
      %71 = vsyncadd [#allocation7], 0
      %s72 = sshll.u32 %s8, 4
      %s73 = int_to_ptr.hbm [resolvable:$true] %s72
      %s74 = sshll.u32 [#allocation8], 4
      %s75 = int_to_ptr.vmem [resolvable:$true] %s74
      %80 = dma.hbm_to_vmem [thread:$0]  %s73, 512, %s75, [#allocation7], 128, 128, 8
    $region37: #{tpu_custom_call.1} parent=1 // pred_fallthru
      _
    // Predicated region
    $region38: #{tpu_custom_call.1} parent=1 // pred_check
      _
    $region39: #{tpu_custom_call.1} parent=1 // pred_check_branch
      %82 = sbr.rel (0) target = $region41
    $region40: #{tpu_custom_call.1} parent=1 // pred_region
      _
    $region41: #{tpu_custom_call.1} parent=1 // pred_fallthru
      _
    // Predicated region
    $region42: #{tpu_custom_call.1} parent=1 // pred_check
      _
    $region43: #{tpu_custom_call.1} parent=1 // pred_check_branch
      %84 = sbr.rel (0) target = $region45
    $region44: #{tpu_custom_call.1} parent=1 // pred_region
      _
    $region45: #{tpu_custom_call.1} parent=1 // pred_fallthru
      _
    // Predicated region
    $region46: #{tpu_custom_call.1} parent=1 // pred_check
      _
    $region47: #{tpu_custom_call.1} parent=1 // pred_check_branch
      %86 = sbr.rel (0) target = $region49
    $region48: #{tpu_custom_call.1} parent=1 // pred_region
      _
    $region49: #{tpu_custom_call.1} parent=1 // pred_fallthru
      _
    // Predicated region
    $region50: #{tpu_custom_call.1} parent=1 // pred_check
      _
    $region51: #{tpu_custom_call.1} parent=1 // pred_check_branch
      %88 = sbr.rel (0) target = $region53
    $region52: #{tpu_custom_call.1} parent=1 // pred_region
      %90 = vsyncadd [#allocation10], 0
      %s91 = sshll.u32 %s12, 4
      %s92 = int_to_ptr.hbm [resolvable:$true] %s91
      %s93 = sshll.u32 [#allocation9], 4
      %s94 = int_to_ptr.vmem [resolvable:$true] %s93
      %99 = dma.hbm_to_vmem [thread:$0]  %s92, 512, %s94, [#allocation10], 128, 128, 8
    $region53: #{tpu_custom_call.1} parent=1 // pred_fallthru
      _
    // Predicated region
    $region54: #{tpu_custom_call.1} parent=1 // pred_check
      _
    $region55: #{tpu_custom_call.1} parent=1 // pred_check_branch
      %101 = sbr.rel (0) target = $region57
    $region56: #{tpu_custom_call.1} parent=1 // pred_region
      _
    $region57: #{tpu_custom_call.1} parent=1 // pred_fallthru
      _
    // Predicated region
    $region58: #{tpu_custom_call.1} parent=1 // pred_check
      _
    $region59: #{tpu_custom_call.1} parent=1 // pred_check_branch
      %103 = sbr.rel (0) target = $region61
    $region60: #{tpu_custom_call.1} parent=1 // pred_region
      _
    $region61: #{tpu_custom_call.1} parent=1 // pred_fallthru
      _
    // Predicated region
    $region62: #{tpu_custom_call.1} parent=1 // pred_check
      _
    $region63: #{tpu_custom_call.1} parent=1 // pred_check_branch
      %105 = sbr.rel (0) target = $region65
    $region64: #{tpu_custom_call.1} parent=1 // pred_region
      _
    $region65: #{tpu_custom_call.1} parent=1 // pred_fallthru
      _
    // Predicated region
    $region66: #{tpu_custom_call.1} parent=1 // pred_check
      _
    $region67: #{tpu_custom_call.1} parent=1 // pred_check_branch
      %107 = sbr.rel (0) target = $region69
    $region68: #{tpu_custom_call.1} parent=1 // pred_region
      _
    $region69: #{tpu_custom_call.1} parent=1 // pred_fallthru
      _
    // Predicated region
    $region70: #{tpu_custom_call.1} parent=1 // pred_check
      _
    $region71: #{tpu_custom_call.1} parent=1 // pred_check_branch
      %109 = sbr.rel (0) target = $region73
    $region72: #{tpu_custom_call.1} parent=1 // pred_region
      _
    $region73: #{tpu_custom_call.1} parent=1 // pred_fallthru
      _
    // Predicated region
    $region74: #{tpu_custom_call.1} parent=1 // pred_check
      _
    $region75: #{tpu_custom_call.1} parent=1 // pred_check_branch
      %111 = sbr.rel (0) target = $region77
    $region76: #{tpu_custom_call.1} parent=1 // pred_region
      %113 = dma.done [#allocation4], 256
    $region77: #{tpu_custom_call.1} parent=1 // pred_fallthru
      _
    // Predicated region
    $region78: #{tpu_custom_call.1} parent=1 // pred_check
      _
    $region79: #{tpu_custom_call.1} parent=1 // pred_check_branch
      %115 = sbr.rel (0) target = $region81
    $region80: #{tpu_custom_call.1} parent=1 // pred_region
      %117 = dma.done [#allocation7], 256
    $region81: #{tpu_custom_call.1} parent=1 // pred_fallthru
      _
    // Predicated region
    $region82: #{tpu_custom_call.1} parent=1 // pred_check
      _
    $region83: #{tpu_custom_call.1} parent=1 // pred_check_branch
      %119 = sbr.rel (0) target = $region85
    $region84: #{tpu_custom_call.1} parent=1 // pred_region
      %121 = dma.done [#allocation7], 512
    $region85: #{tpu_custom_call.1} parent=1 // pred_fallthru
      _
    // Predicated region
    $region86: #{tpu_custom_call.1} parent=1 // pred_check
      _
    $region87: #{tpu_custom_call.1} parent=1 // pred_check_branch
      %123 = sbr.rel (0) target = $region89
    $region88: #{tpu_custom_call.1} parent=1 // pred_region
      %125 = dma.done [#allocation10], 512
    $region89: #{tpu_custom_call.1} parent=1 // pred_fallthru
      _
    %v126 = vld [vmem:[#allocation3] sm:$0xff]
    %v127 = vld [vmem:[#allocation3 + $0x8] sm:$0xff]
    %v128 = vld [vmem:[#allocation6] sm:$0xff]
    %v129 = vld [vmem:[#allocation6 + $0x8] sm:$0xff]
    %v130 = vadd.f32 %v126, %v128
    %v131 = vadd.f32 %v127, %v129
    %v132 = vld [vmem:[%s2] sm:$0xff]
    %v133 = vld [vmem:[%s2 + $0x8] sm:$0xff]
    %v134 = vld [vmem:[%s2 + $0x10] sm:$0xff]
    %v135 = vld [vmem:[%s2 + $0x18] sm:$0xff]
    %v136 = vld [vmem:[%s5] sm:$0x1]
    %v138 = vperm.slane %v136, 0
    %vm140 = vcmask 261120
    %v142 = vsel %vm140, %v130, 0
    %v145 = vsel %vm140, %v131, 0
    %147 = vmatpush.msra.mxu0 0.0
    %148 = vmatpush.msra.mxu0 0.0
    %149 = vmatpush.msra.mxu0 0.0
    %150 = vmatpush.msra.mxu0 0.0
    %151 = vmatpush.msra.mxu0 0.0
    %152 = vmatpush.msra.mxu0 0.0
    %153 = vmatpush.msra.mxu0 0.0
    %154 = vmatpush.msra.mxu0 0.0
    %155 = vmatpush.msra.mxu0 0.0
    %156 = vmatpush.msra.mxu0 0.0
    %157 = vmatpush.msra.mxu0 0.0
    %158 = vmatpush.msra.mxu0 0.0
    %159 = vmatpush.msra.mxu0 %v135
    %160 = vmatpush.msra.mxu0 %v134
    %161 = vmatpush.msra.mxu0 %v133
    %162 = vmatpush.msra.mxu0 %v132
    %163 = vmatmul.f32.gmra.mxu0 %v142
    %v164 = vpop.f32.mrf.mxu0
    %v165 = vadd.f32 %v138, %v164
    %166 = vmatmul.f32.gmra.mxu0 %v145
    %v167 = vpop.f32.mrf.mxu0
    %v168 = vadd.f32 %v138, %v167
    %169 = vdwg.mxu0
    %v170 = vld [vmem:[%s3] sm:$0xff]
    %v171 = vld [vmem:[%s3 + $0x8] sm:$0xff]
    %v172 = vld [vmem:[%s3 + $0x10] sm:$0xff]
    %v173 = vld [vmem:[%s3 + $0x18] sm:$0xff]
    %v174 = vld [vmem:[%s6] sm:$0x1]
    %v176 = vperm.slane %v174, 0
    %178 = vmatpush.msra.mxu0 0.0
    %179 = vmatpush.msra.mxu0 0.0
    %180 = vmatpush.msra.mxu0 0.0
    %181 = vmatpush.msra.mxu0 0.0
    %182 = vmatpush.msra.mxu0 0.0
    %183 = vmatpush.msra.mxu0 0.0
    %184 = vmatpush.msra.mxu0 0.0
    %185 = vmatpush.msra.mxu0 0.0
    %186 = vmatpush.msra.mxu0 0.0
    %187 = vmatpush.msra.mxu0 0.0
    %188 = vmatpush.msra.mxu0 0.0
    %189 = vmatpush.msra.mxu0 0.0
    %190 = vmatpush.msra.mxu0 %v173
    %191 = vmatpush.msra.mxu0 %v172
    %192 = vmatpush.msra.mxu0 %v171
    %193 = vmatpush.msra.mxu0 %v170
    %194 = vmatmul.f32.gmra.mxu0 %v142
    %v195 = vpop.f32.mrf.mxu0
    %v196 = vadd.f32 %v176, %v195
    %197 = vmatmul.f32.gmra.mxu0 %v145
    %v198 = vpop.f32.mrf.mxu0
    %v199 = vadd.f32 %v176, %v198
    %200 = vdwg.mxu0
    %v201 = vld [vmem:[%s4] sm:$0xff]
    %v202 = vld [vmem:[%s4 + $0x8] sm:$0xff]
    %v203 = vld [vmem:[%s4 + $0x10] sm:$0xff]
    %v204 = vld [vmem:[%s4 + $0x18] sm:$0xff]
    %v205 = vld [vmem:[%s7] sm:$0x1]
    %v207 = vperm.slane %v205, 0
    %v210 = vsel %vm140, %v126, 0
    %v213 = vsel %vm140, %v127, 0
    %215 = vmatpush.msra.mxu0 0.0
    %216 = vmatpush.msra.mxu0 0.0
    %217 = vmatpush.msra.mxu0 0.0
    %218 = vmatpush.msra.mxu0 0.0
    %219 = vmatpush.msra.mxu0 0.0
    %220 = vmatpush.msra.mxu0 0.0
    %221 = vmatpush.msra.mxu0 0.0
    %222 = vmatpush.msra.mxu0 0.0
    %223 = vmatpush.msra.mxu0 0.0
    %224 = vmatpush.msra.mxu0 0.0
    %225 = vmatpush.msra.mxu0 0.0
    %226 = vmatpush.msra.mxu0 0.0
    %227 = vmatpush.msra.mxu0 %v204
    %228 = vmatpush.msra.mxu0 %v203
    %229 = vmatpush.msra.mxu0 %v202
    %230 = vmatpush.msra.mxu0 %v201
    %231 = vmatmul.f32.gmra.mxu0 %v210
    %v232 = vpop.f32.mrf.mxu0
    %v233 = vadd.f32 %v207, %v232
    %234 = vmatmul.f32.gmra.mxu0 %v213
    %v235 = vpop.f32.mrf.mxu0
    %v236 = vadd.f32 %v207, %v235
    %237 = vdwg.mxu0
    %vm238 = vcmask 64512
    %v240 = vsel %vm238, %v165, 0
    %v243 = vsel %vm238, %v196, 0
    %245 = vmatpush.xpose.msra.mxu0 0.0
    %246 = vmatpush.xpose.msra.mxu0 0.0
    %247 = vmatpush.xpose.msra.mxu0 0.0
    %248 = vmatpush.xpose.msra.mxu0 0.0
    %249 = vmatpush.xpose.msra.mxu0 0.0
    %250 = vmatpush.xpose.msra.mxu0 0.0
    %251 = vmatpush.xpose.msra.mxu0 0.0
    %252 = vmatpush.xpose.msra.mxu0 0.0
    %253 = vmatpush.xpose.msra.mxu0 0.0
    %254 = vmatpush.xpose.msra.mxu0 0.0
    %255 = vmatpush.xpose.msra.mxu0 0.0
    %256 = vmatpush.xpose.msra.mxu0 0.0
    %257 = vmatpush.xpose.msra.mxu0 0.0
    %258 = vmatpush.xpose.msra.mxu0 0.0
    %259 = vmatpush.xpose.msra.mxu0 0.0
    %260 = vmatpush.xpose.msra.mxu0 %v243
    %261 = vmatmul.f32.gmra.mxu0 %v240
    %v262 = vpop.f32.mrf.mxu0
    %v263 = vadd.f32 0.0, %v262
    %264 = vdwg.mxu0
    %v266 = vsel %vm238, %v168, 0
    %v269 = vsel %vm238, %v199, 0
    %271 = vmatpush.xpose.msra.mxu0 0.0
    %272 = vmatpush.xpose.msra.mxu0 0.0
    %273 = vmatpush.xpose.msra.mxu0 0.0
    %274 = vmatpush.xpose.msra.mxu0 0.0
    %275 = vmatpush.xpose.msra.mxu0 0.0
    %276 = vmatpush.xpose.msra.mxu0 0.0
    %277 = vmatpush.xpose.msra.mxu0 0.0
    %278 = vmatpush.xpose.msra.mxu0 0.0
    %279 = vmatpush.xpose.msra.mxu0 0.0
    %280 = vmatpush.xpose.msra.mxu0 0.0
    %281 = vmatpush.xpose.msra.mxu0 0.0
    %282 = vmatpush.xpose.msra.mxu0 0.0
    %283 = vmatpush.xpose.msra.mxu0 0.0
    %284 = vmatpush.xpose.msra.mxu0 0.0
    %285 = vmatpush.xpose.msra.mxu0 0.0
    %286 = vmatpush.xpose.msra.mxu0 %v269
    %287 = vmatmul.f32.gmra.mxu0 %v266
    %v288 = vpop.f32.mrf.mxu0
    %v289 = vadd.f32 0.0, %v288
    %290 = vdwg.mxu0
    %v291 = vsel %vm238, %v263, -inf
    %292 = vmax.xlane.f32.xlu0 %v291
    %v293 = vpop.xlane.xlu0 %292
    %v294 = vsel %vm238, %v289, -inf
    %295 = vmax.xlane.f32.xlu0 %v294
    %v296 = vpop.xlane.xlu0 %295
    %v297 = vsub.f32 %v263, %v293
    %v298 = vsub.f32 %v289, %v296
    %v299 = vmul.f32 %v297, 1.442695
    %v300 = vpow.pop %v299
    %v301 = vmul.f32 %v298, 1.442695
    %v302 = vpow.pop %v301
    %v303 = vsel %vm238, %v300, 0.0
    %304 = vadd.xlane.f32.xlu0 %v303
    %v305 = vpop.xlane.xlu0 %304
    %v306 = vsel %vm238, %v302, 0.0
    %307 = vadd.xlane.f32.xlu0 %v306
    %v308 = vpop.xlane.xlu0 %307
    %v309 = vrcp.pop %v305
    %v310 = vmul.f32 %v305, %v309
    %v311 = vsub.f32 1.0, %v310
    %v312 = vmul.f32 %v309, %v311
    %v313 = vadd.f32 %v309, %v312
    %vm314 = vweird.f32 %v305
    %vm315 = vweird.f32 %v309
    %vm316 = vmor %vm314, %vm315
    %v317 = vsel %vm316, %v309, %v313
    %v318 = vand.u32 2147483647, %v305
    %vm319 = vcmp.eq.f32.partialorder %v318, 8.507059e+37
    %v320 = vand.u32 %v305, 2147483648
    %v321 = vor.u32 1.1754944e-38, %v320
    %v322 = vsel %vm319, %v321, %v317
    %v323 = vrcp.pop %v308
    %v324 = vmul.f32 %v308, %v323
    %v325 = vsub.f32 1.0, %v324
    %v326 = vmul.f32 %v323, %v325
    %v327 = vadd.f32 %v323, %v326
    %vm328 = vweird.f32 %v308
    %vm329 = vweird.f32 %v323
    %vm330 = vmor %vm328, %vm329
    %v331 = vsel %vm330, %v323, %v327
    %v332 = vand.u32 2147483647, %v308
    %vm333 = vcmp.eq.f32.partialorder %v332, 8.507059e+37
    %v334 = vand.u32 %v308, 2147483648
    %v335 = vor.u32 1.1754944e-38, %v334
    %v336 = vsel %vm333, %v335, %v331
    %v337 = vmul.f32 %v300, %v322
    %v338 = vmul.f32 %v302, %v336
    %v339 = vmul.f32 %v337, 0.25
    %v340 = vmul.f32 %v338, 0.25
    %341 = vst.msk [vmem:[#allocation12] sm:$0xff] %vm238, %v339
    %342 = vst.msk [vmem:[#allocation12 + $0x8] sm:$0xff] %vm238, %v340
    %v344 = vsel %vm238, %v337, 0
    %346 = vmatpush.msra.mxu0 0.0
    %347 = vmatpush.msra.mxu0 0.0
    %348 = vmatpush.msra.mxu0 0.0
    %349 = vmatpush.msra.mxu0 0.0
    %350 = vmatpush.msra.mxu0 0.0
    %351 = vmatpush.msra.mxu0 0.0
    %352 = vmatpush.msra.mxu0 0.0
    %353 = vmatpush.msra.mxu0 0.0
    %354 = vmatpush.msra.mxu0 0.0
    %355 = vmatpush.msra.mxu0 0.0
    %356 = vmatpush.msra.mxu0 0.0
    %357 = vmatpush.msra.mxu0 0.0
    %358 = vmatpush.msra.mxu0 0.0
    %359 = vmatpush.msra.mxu0 0.0
    %360 = vmatpush.msra.mxu0 0.0
    %361 = vmatpush.msra.mxu0 %v233
    %362 = vmatmul.f32.gmra.mxu0 %v344
    %v363 = vpop.f32.mrf.mxu0
    %v364 = vadd.f32 0.0, %v363
    %365 = vdwg.mxu0
    %v367 = vsel %vm238, %v338, 0
    %369 = vmatpush.msra.mxu0 0.0
    %370 = vmatpush.msra.mxu0 0.0
    %371 = vmatpush.msra.mxu0 0.0
    %372 = vmatpush.msra.mxu0 0.0
    %373 = vmatpush.msra.mxu0 0.0
    %374 = vmatpush.msra.mxu0 0.0
    %375 = vmatpush.msra.mxu0 0.0
    %376 = vmatpush.msra.mxu0 0.0
    %377 = vmatpush.msra.mxu0 0.0
    %378 = vmatpush.msra.mxu0 0.0
    %379 = vmatpush.msra.mxu0 0.0
    %380 = vmatpush.msra.mxu0 0.0
    %381 = vmatpush.msra.mxu0 0.0
    %382 = vmatpush.msra.mxu0 0.0
    %383 = vmatpush.msra.mxu0 0.0
    %384 = vmatpush.msra.mxu0 %v236
    %385 = vmatmul.f32.gmra.mxu0 %v367
    %v386 = vpop.f32.mrf.mxu0
    %v387 = vadd.f32 0.0, %v386
    %388 = vdwg.mxu0
    %389 = vst.msk [vmem:[#allocation2] sm:$0xff] %vm238, %v364
    %390 = vst.msk [vmem:[#allocation2 + $0x8] sm:$0xff] %vm238, %v387
    %391 = vrot.lane.b32.xlu0 %v165, 120
    %v392 = vpop.permute.xlu0 %391
    %393 = vrot.lane.b32.xlu0 %v196, 120
    %v394 = vpop.permute.xlu0 %393
    %v395 = vsel %vm238, %v392, 0
    %v397 = vsel %vm238, %v394, 0
    %399 = vmatpush.xpose.msra.mxu0 0.0
    %400 = vmatpush.xpose.msra.mxu0 0.0
    %401 = vmatpush.xpose.msra.mxu0 0.0
    %402 = vmatpush.xpose.msra.mxu0 0.0
    %403 = vmatpush.xpose.msra.mxu0 0.0
    %404 = vmatpush.xpose.msra.mxu0 0.0
    %405 = vmatpush.xpose.msra.mxu0 0.0
    %406 = vmatpush.xpose.msra.mxu0 0.0
    %407 = vmatpush.xpose.msra.mxu0 0.0
    %408 = vmatpush.xpose.msra.mxu0 0.0
    %409 = vmatpush.xpose.msra.mxu0 0.0
    %410 = vmatpush.xpose.msra.mxu0 0.0
    %411 = vmatpush.xpose.msra.mxu0 0.0
    %412 = vmatpush.xpose.msra.mxu0 0.0
    %413 = vmatpush.xpose.msra.mxu0 0.0
    %414 = vmatpush.xpose.msra.mxu0 %v397
    %415 = vmatmul.f32.gmra.mxu0 %v395
    %v416 = vpop.f32.mrf.mxu0
    %v417 = vadd.f32 0.0, %v416
    %418 = vdwg.mxu0
    %419 = vrot.lane.b32.xlu0 %v168, 120
    %v420 = vpop.permute.xlu0 %419
    %421 = vrot.lane.b32.xlu0 %v199, 120
    %v422 = vpop.permute.xlu0 %421
    %v423 = vsel %vm238, %v420, 0
    %v425 = vsel %vm238, %v422, 0
    %427 = vmatpush.xpose.msra.mxu0 0.0
    %428 = vmatpush.xpose.msra.mxu0 0.0
    %429 = vmatpush.xpose.msra.mxu0 0.0
    %430 = vmatpush.xpose.msra.mxu0 0.0
    %431 = vmatpush.xpose.msra.mxu0 0.0
    %432 = vmatpush.xpose.msra.mxu0 0.0
    %433 = vmatpush.xpose.msra.mxu0 0.0
    %434 = vmatpush.xpose.msra.mxu0 0.0
    %435 = vmatpush.xpose.msra.mxu0 0.0
    %436 = vmatpush.xpose.msra.mxu0 0.0
    %437 = vmatpush.xpose.msra.mxu0 0.0
    %438 = vmatpush.xpose.msra.mxu0 0.0
    %439 = vmatpush.xpose.msra.mxu0 0.0
    %440 = vmatpush.xpose.msra.mxu0 0.0
    %441 = vmatpush.xpose.msra.mxu0 0.0
    %442 = vmatpush.xpose.msra.mxu0 %v425
    %443 = vmatmul.f32.gmra.mxu0 %v423
    %v444 = vpop.f32.mrf.mxu0
    %v445 = vadd.f32 0.0, %v444
    %446 = vdwg.mxu0
    %v447 = vsel %vm238, %v417, -inf
    %448 = vmax.xlane.f32.xlu0 %v447
    %v449 = vpop.xlane.xlu0 %448
    %v450 = vsel %vm238, %v445, -inf
    %451 = vmax.xlane.f32.xlu0 %v450
    %v452 = vpop.xlane.xlu0 %451
    %v453 = vsub.f32 %v417, %v449
    %v454 = vsub.f32 %v445, %v452
    %v455 = vmul.f32 %v453, 1.442695
    %v456 = vpow.pop %v455
    %v457 = vmul.f32 %v454, 1.442695
    %v458 = vpow.pop %v457
    %v459 = vsel %vm238, %v456, 0.0
    %460 = vadd.xlane.f32.xlu0 %v459
    %v461 = vpop.xlane.xlu0 %460
    %v462 = vsel %vm238, %v458, 0.0
    %463 = vadd.xlane.f32.xlu0 %v462
    %v464 = vpop.xlane.xlu0 %463
    %v465 = vrcp.pop %v461
    %v466 = vmul.f32 %v461, %v465
    %v467 = vsub.f32 1.0, %v466
    %v468 = vmul.f32 %v465, %v467
    %v469 = vadd.f32 %v465, %v468
    %vm470 = vweird.f32 %v461
    %vm471 = vweird.f32 %v465
    %vm472 = vmor %vm470, %vm471
    %v473 = vsel %vm472, %v465, %v469
    %v474 = vand.u32 2147483647, %v461
    %vm475 = vcmp.eq.f32.partialorder %v474, 8.507059e+37
    %v476 = vand.u32 %v461, 2147483648
    %v477 = vor.u32 1.1754944e-38, %v476
    %v478 = vsel %vm475, %v477, %v473
    %v479 = vrcp.pop %v464
    %v480 = vmul.f32 %v464, %v479
    %v481 = vsub.f32 1.0, %v480
    %v482 = vmul.f32 %v479, %v481
    %v483 = vadd.f32 %v479, %v482
    %vm484 = vweird.f32 %v464
    %vm485 = vweird.f32 %v479
    %vm486 = vmor %vm484, %vm485
    %v487 = vsel %vm486, %v479, %v483
    %v488 = vand.u32 2147483647, %v464
    %vm489 = vcmp.eq.f32.partialorder %v488, 8.507059e+37
    %v490 = vand.u32 %v464, 2147483648
    %v491 = vor.u32 1.1754944e-38, %v490
    %v492 = vsel %vm489, %v491, %v487
    %v493 = vmul.f32 %v456, %v478
    %v494 = vmul.f32 %v458, %v492
    %v495 = vmul.f32 %v493, 0.25
    %v496 = vmul.f32 %v494, 0.25
    %v497 = vld [vmem:[#allocation12] sm:$0xff]
    %v498 = vld [vmem:[#allocation12 + $0x8] sm:$0xff]
    %v499 = vadd.f32 %v497, %v495
    %v500 = vadd.f32 %v498, %v496
    %501 = vst.msk [vmem:[#allocation12] sm:$0xff] %vm238, %v499
    %502 = vst.msk [vmem:[#allocation12 + $0x8] sm:$0xff] %vm238, %v500
    %504 = vrot.lane.b32.xlu0 %v233, 120
    %v505 = vpop.permute.xlu0 %504
    %v508 = vsel %vm238, %v493, 0
    %510 = vmatpush.msra.mxu0 0.0
    %511 = vmatpush.msra.mxu0 0.0
    %512 = vmatpush.msra.mxu0 0.0
    %513 = vmatpush.msra.mxu0 0.0
    %514 = vmatpush.msra.mxu0 0.0
    %515 = vmatpush.msra.mxu0 0.0
    %516 = vmatpush.msra.mxu0 0.0
    %517 = vmatpush.msra.mxu0 0.0
    %518 = vmatpush.msra.mxu0 0.0
    %519 = vmatpush.msra.mxu0 0.0
    %520 = vmatpush.msra.mxu0 0.0
    %521 = vmatpush.msra.mxu0 0.0
    %522 = vmatpush.msra.mxu0 0.0
    %523 = vmatpush.msra.mxu0 0.0
    %524 = vmatpush.msra.mxu0 0.0
    %525 = vmatpush.msra.mxu0 %v505
    %526 = vmatmul.f32.gmra.mxu0 %v508
    %v527 = vpop.f32.mrf.mxu0
    %v528 = vadd.f32 0.0, %v527
    %529 = vdwg.mxu0
    %531 = vrot.lane.b32.xlu0 %v236, 120
    %v532 = vpop.permute.xlu0 %531
    %v535 = vsel %vm238, %v494, 0
    %537 = vmatpush.msra.mxu0 0.0
    %538 = vmatpush.msra.mxu0 0.0
    %539 = vmatpush.msra.mxu0 0.0
    %540 = vmatpush.msra.mxu0 0.0
    %541 = vmatpush.msra.mxu0 0.0
    %542 = vmatpush.msra.mxu0 0.0
    %543 = vmatpush.msra.mxu0 0.0
    %544 = vmatpush.msra.mxu0 0.0
    %545 = vmatpush.msra.mxu0 0.0
    %546 = vmatpush.msra.mxu0 0.0
    %547 = vmatpush.msra.mxu0 0.0
    %548 = vmatpush.msra.mxu0 0.0
    %549 = vmatpush.msra.mxu0 0.0
    %550 = vmatpush.msra.mxu0 0.0
    %551 = vmatpush.msra.mxu0 0.0
    %552 = vmatpush.msra.mxu0 %v532
    %553 = vmatmul.f32.gmra.mxu0 %v535
    %v554 = vpop.f32.mrf.mxu0
    %v555 = vadd.f32 0.0, %v554
    %556 = vdwg.mxu0
    %559 = vrot.lane.b32.xlu0 %v528, 8
    %v560 = vpop.permute.xlu0 %559
    %561 = vrot.lane.b32.xlu0 %v555, 8
    %v562 = vpop.permute.xlu0 %561
    %vm565 = vcmask 130112
    %566 = vst.msk [vmem:[#allocation2] sm:$0xff] %vm565, %v560
    %567 = vst.msk [vmem:[#allocation2 + $0x8] sm:$0xff] %vm565, %v562
    %568 = vrot.lane.b32.xlu0 %v165, 112
    %v569 = vpop.permute.xlu0 %568
    %570 = vrot.lane.b32.xlu0 %v196, 112
    %v571 = vpop.permute.xlu0 %570
    %v572 = vsel %vm238, %v569, 0
    %v574 = vsel %vm238, %v571, 0
    %576 = vmatpush.xpose.msra.mxu0 0.0
    %577 = vmatpush.xpose.msra.mxu0 0.0
    %578 = vmatpush.xpose.msra.mxu0 0.0
    %579 = vmatpush.xpose.msra.mxu0 0.0
    %580 = vmatpush.xpose.msra.mxu0 0.0
    %581 = vmatpush.xpose.msra.mxu0 0.0
    %582 = vmatpush.xpose.msra.mxu0 0.0
    %583 = vmatpush.xpose.msra.mxu0 0.0
    %584 = vmatpush.xpose.msra.mxu0 0.0
    %585 = vmatpush.xpose.msra.mxu0 0.0
    %586 = vmatpush.xpose.msra.mxu0 0.0
    %587 = vmatpush.xpose.msra.mxu0 0.0
    %588 = vmatpush.xpose.msra.mxu0 0.0
    %589 = vmatpush.xpose.msra.mxu0 0.0
    %590 = vmatpush.xpose.msra.mxu0 0.0
    %591 = vmatpush.xpose.msra.mxu0 %v574
    %592 = vmatmul.f32.gmra.mxu0 %v572
    %v593 = vpop.f32.mrf.mxu0
    %v594 = vadd.f32 0.0, %v593
    %595 = vdwg.mxu0
    %596 = vrot.lane.b32.xlu0 %v168, 112
    %v597 = vpop.permute.xlu0 %596
    %598 = vrot.lane.b32.xlu0 %v199, 112
    %v599 = vpop.permute.xlu0 %598
    %v600 = vsel %vm238, %v597, 0
    %v602 = vsel %vm238, %v599, 0
    %604 = vmatpush.xpose.msra.mxu0 0.0
    %605 = vmatpush.xpose.msra.mxu0 0.0
    %606 = vmatpush.xpose.msra.mxu0 0.0
    %607 = vmatpush.xpose.msra.mxu0 0.0
    %608 = vmatpush.xpose.msra.mxu0 0.0
    %609 = vmatpush.xpose.msra.mxu0 0.0
    %610 = vmatpush.xpose.msra.mxu0 0.0
    %611 = vmatpush.xpose.msra.mxu0 0.0
    %612 = vmatpush.xpose.msra.mxu0 0.0
    %613 = vmatpush.xpose.msra.mxu0 0.0
    %614 = vmatpush.xpose.msra.mxu0 0.0
    %615 = vmatpush.xpose.msra.mxu0 0.0
    %616 = vmatpush.xpose.msra.mxu0 0.0
    %617 = vmatpush.xpose.msra.mxu0 0.0
    %618 = vmatpush.xpose.msra.mxu0 0.0
    %619 = vmatpush.xpose.msra.mxu0 %v602
    %620 = vmatmul.f32.gmra.mxu0 %v600
    %v621 = vpop.f32.mrf.mxu0
    %v622 = vadd.f32 0.0, %v621
    %623 = vdwg.mxu0
    %v624 = vsel %vm238, %v594, -inf
    %625 = vmax.xlane.f32.xlu0 %v624
    %v626 = vpop.xlane.xlu0 %625
    %v627 = vsel %vm238, %v622, -inf
    %628 = vmax.xlane.f32.xlu0 %v627
    %v629 = vpop.xlane.xlu0 %628
    %v630 = vsub.f32 %v594, %v626
    %v631 = vsub.f32 %v622, %v629
    %v632 = vmul.f32 %v630, 1.442695
    %v633 = vpow.pop %v632
    %v634 = vmul.f32 %v631, 1.442695
    %v635 = vpow.pop %v634
    %v636 = vsel %vm238, %v633, 0.0
    %637 = vadd.xlane.f32.xlu0 %v636
    %v638 = vpop.xlane.xlu0 %637
    %v639 = vsel %vm238, %v635, 0.0
    %640 = vadd.xlane.f32.xlu0 %v639
    %v641 = vpop.xlane.xlu0 %640
    %v642 = vrcp.pop %v638
    %v643 = vmul.f32 %v638, %v642
    %v644 = vsub.f32 1.0, %v643
    %v645 = vmul.f32 %v642, %v644
    %v646 = vadd.f32 %v642, %v645
    %vm647 = vweird.f32 %v638
    %vm648 = vweird.f32 %v642
    %vm649 = vmor %vm647, %vm648
    %v650 = vsel %vm649, %v642, %v646
    %v651 = vand.u32 2147483647, %v638
    %vm652 = vcmp.eq.f32.partialorder %v651, 8.507059e+37
    %v653 = vand.u32 %v638, 2147483648
    %v654 = vor.u32 1.1754944e-38, %v653
    %v655 = vsel %vm652, %v654, %v650
    %v656 = vrcp.pop %v641
    %v657 = vmul.f32 %v641, %v656
    %v658 = vsub.f32 1.0, %v657
    %v659 = vmul.f32 %v656, %v658
    %v660 = vadd.f32 %v656, %v659
    %vm661 = vweird.f32 %v641
    %vm662 = vweird.f32 %v656
    %vm663 = vmor %vm661, %vm662
    %v664 = vsel %vm663, %v656, %v660
    %v665 = vand.u32 2147483647, %v641
    %vm666 = vcmp.eq.f32.partialorder %v665, 8.507059e+37
    %v667 = vand.u32 %v641, 2147483648
    %v668 = vor.u32 1.1754944e-38, %v667
    %v669 = vsel %vm666, %v668, %v664
    %v670 = vmul.f32 %v633, %v655
    %v671 = vmul.f32 %v635, %v669
    %v672 = vmul.f32 %v670, 0.25
    %v673 = vmul.f32 %v671, 0.25
    %v674 = vld [vmem:[#allocation12] sm:$0xff]
    %v675 = vld [vmem:[#allocation12 + $0x8] sm:$0xff]
    %v676 = vadd.f32 %v674, %v672
    %v677 = vadd.f32 %v675, %v673
    %678 = vst.msk [vmem:[#allocation12] sm:$0xff] %vm238, %v676
    %679 = vst.msk [vmem:[#allocation12 + $0x8] sm:$0xff] %vm238, %v677
    %680 = vrot.lane.b32.xlu0 %v233, 112
    %v681 = vpop.permute.xlu0 %680
    %v684 = vsel %vm238, %v670, 0
    %686 = vmatpush.msra.mxu0 0.0
    %687 = vmatpush.msra.mxu0 0.0
    %688 = vmatpush.msra.mxu0 0.0
    %689 = vmatpush.msra.mxu0 0.0
    %690 = vmatpush.msra.mxu0 0.0
    %691 = vmatpush.msra.mxu0 0.0
    %692 = vmatpush.msra.mxu0 0.0
    %693 = vmatpush.msra.mxu0 0.0
    %694 = vmatpush.msra.mxu0 0.0
    %695 = vmatpush.msra.mxu0 0.0
    %696 = vmatpush.msra.mxu0 0.0
    %697 = vmatpush.msra.mxu0 0.0
    %698 = vmatpush.msra.mxu0 0.0
    %699 = vmatpush.msra.mxu0 0.0
    %700 = vmatpush.msra.mxu0 0.0
    %701 = vmatpush.msra.mxu0 %v681
    %702 = vmatmul.f32.gmra.mxu0 %v684
    %v703 = vpop.f32.mrf.mxu0
    %v704 = vadd.f32 0.0, %v703
    %705 = vdwg.mxu0
    %706 = vrot.lane.b32.xlu0 %v236, 112
    %v707 = vpop.permute.xlu0 %706
    %v710 = vsel %vm238, %v671, 0
    %712 = vmatpush.msra.mxu0 0.0
    %713 = vmatpush.msra.mxu0 0.0
    %714 = vmatpush.msra.mxu0 0.0
    %715 = vmatpush.msra.mxu0 0.0
    %716 = vmatpush.msra.mxu0 0.0
    %717 = vmatpush.msra.mxu0 0.0
    %718 = vmatpush.msra.mxu0 0.0
    %719 = vmatpush.msra.mxu0 0.0
    %720 = vmatpush.msra.mxu0 0.0
    %721 = vmatpush.msra.mxu0 0.0
    %722 = vmatpush.msra.mxu0 0.0
    %723 = vmatpush.msra.mxu0 0.0
    %724 = vmatpush.msra.mxu0 0.0
    %725 = vmatpush.msra.mxu0 0.0
    %726 = vmatpush.msra.mxu0 0.0
    %727 = vmatpush.msra.mxu0 %v707
    %728 = vmatmul.f32.gmra.mxu0 %v710
    %v729 = vpop.f32.mrf.mxu0
    %v730 = vadd.f32 0.0, %v729
    %731 = vdwg.mxu0
    %734 = vrot.lane.b32.xlu0 %v704, 16
    %v735 = vpop.permute.xlu0 %734
    %736 = vrot.lane.b32.xlu0 %v730, 16
    %v737 = vpop.permute.xlu0 %736
    %vm740 = vcmask 195712
    %741 = vst.msk [vmem:[#allocation2] sm:$0xff] %vm740, %v735
    %742 = vst.msk [vmem:[#allocation2 + $0x8] sm:$0xff] %vm740, %v737
    %743 = vrot.lane.b32.xlu0 %v165, 104
    %v744 = vpop.permute.xlu0 %743
    %745 = vrot.lane.b32.xlu0 %v196, 104
    %v746 = vpop.permute.xlu0 %745
    %v747 = vsel %vm238, %v744, 0
    %v749 = vsel %vm238, %v746, 0
    %751 = vmatpush.xpose.msra.mxu0 0.0
    %752 = vmatpush.xpose.msra.mxu0 0.0
    %753 = vmatpush.xpose.msra.mxu0 0.0
    %754 = vmatpush.xpose.msra.mxu0 0.0
    %755 = vmatpush.xpose.msra.mxu0 0.0
    %756 = vmatpush.xpose.msra.mxu0 0.0
    %757 = vmatpush.xpose.msra.mxu0 0.0
    %758 = vmatpush.xpose.msra.mxu0 0.0
    %759 = vmatpush.xpose.msra.mxu0 0.0
    %760 = vmatpush.xpose.msra.mxu0 0.0
    %761 = vmatpush.xpose.msra.mxu0 0.0
    %762 = vmatpush.xpose.msra.mxu0 0.0
    %763 = vmatpush.xpose.msra.mxu0 0.0
    %764 = vmatpush.xpose.msra.mxu0 0.0
    %765 = vmatpush.xpose.msra.mxu0 0.0
    %766 = vmatpush.xpose.msra.mxu0 %v749
    %767 = vmatmul.f32.gmra.mxu0 %v747
    %v768 = vpop.f32.mrf.mxu0
    %v769 = vadd.f32 0.0, %v768
    %770 = vdwg.mxu0
    %771 = vrot.lane.b32.xlu0 %v168, 104
    %v772 = vpop.permute.xlu0 %771
    %773 = vrot.lane.b32.xlu0 %v199, 104
    %v774 = vpop.permute.xlu0 %773
    %v775 = vsel %vm238, %v772, 0
    %v777 = vsel %vm238, %v774, 0
    %779 = vmatpush.xpose.msra.mxu0 0.0
    %780 = vmatpush.xpose.msra.mxu0 0.0
    %781 = vmatpush.xpose.msra.mxu0 0.0
    %782 = vmatpush.xpose.msra.mxu0 0.0
    %783 = vmatpush.xpose.msra.mxu0 0.0
    %784 = vmatpush.xpose.msra.mxu0 0.0
    %785 = vmatpush.xpose.msra.mxu0 0.0
    %786 = vmatpush.xpose.msra.mxu0 0.0
    %787 = vmatpush.xpose.msra.mxu0 0.0
    %788 = vmatpush.xpose.msra.mxu0 0.0
    %789 = vmatpush.xpose.msra.mxu0 0.0
    %790 = vmatpush.xpose.msra.mxu0 0.0
    %791 = vmatpush.xpose.msra.mxu0 0.0
    %792 = vmatpush.xpose.msra.mxu0 0.0
    %793 = vmatpush.xpose.msra.mxu0 0.0
    %794 = vmatpush.xpose.msra.mxu0 %v777
    %795 = vmatmul.f32.gmra.mxu0 %v775
    %v796 = vpop.f32.mrf.mxu0
    %v797 = vadd.f32 0.0, %v796
    %798 = vdwg.mxu0
    %v799 = vsel %vm238, %v769, -inf
    %800 = vmax.xlane.f32.xlu0 %v799
    %v801 = vpop.xlane.xlu0 %800
    %v802 = vsel %vm238, %v797, -inf
    %803 = vmax.xlane.f32.xlu0 %v802
    %v804 = vpop.xlane.xlu0 %803
    %v805 = vsub.f32 %v769, %v801
    %v806 = vsub.f32 %v797, %v804
    %v807 = vmul.f32 %v805, 1.442695
    %v808 = vpow.pop %v807
    %v809 = vmul.f32 %v806, 1.442695
    %v810 = vpow.pop %v809
    %v811 = vsel %vm238, %v808, 0.0
    %812 = vadd.xlane.f32.xlu0 %v811
    %v813 = vpop.xlane.xlu0 %812
    %v814 = vsel %vm238, %v810, 0.0
    %815 = vadd.xlane.f32.xlu0 %v814
    %v816 = vpop.xlane.xlu0 %815
    %v817 = vrcp.pop %v813
    %v818 = vmul.f32 %v813, %v817
    %v819 = vsub.f32 1.0, %v818
    %v820 = vmul.f32 %v817, %v819
    %v821 = vadd.f32 %v817, %v820
    %vm822 = vweird.f32 %v813
    %vm823 = vweird.f32 %v817
    %vm824 = vmor %vm822, %vm823
    %v825 = vsel %vm824, %v817, %v821
    %v826 = vand.u32 2147483647, %v813
    %vm827 = vcmp.eq.f32.partialorder %v826, 8.507059e+37
    %v828 = vand.u32 %v813, 2147483648
    %v829 = vor.u32 1.1754944e-38, %v828
    %v830 = vsel %vm827, %v829, %v825
    %v831 = vrcp.pop %v816
    %v832 = vmul.f32 %v816, %v831
    %v833 = vsub.f32 1.0, %v832
    %v834 = vmul.f32 %v831, %v833
    %v835 = vadd.f32 %v831, %v834
    %vm836 = vweird.f32 %v816
    %vm837 = vweird.f32 %v831
    %vm838 = vmor %vm836, %vm837
    %v839 = vsel %vm838, %v831, %v835
    %v840 = vand.u32 2147483647, %v816
    %vm841 = vcmp.eq.f32.partialorder %v840, 8.507059e+37
    %v842 = vand.u32 %v816, 2147483648
    %v843 = vor.u32 1.1754944e-38, %v842
    %v844 = vsel %vm841, %v843, %v839
    %v845 = vmul.f32 %v808, %v830
    %v846 = vmul.f32 %v810, %v844
    %v847 = vmul.f32 %v845, 0.25
    %v848 = vmul.f32 %v846, 0.25
    %v849 = vld [vmem:[#allocation12] sm:$0xff]
    %v850 = vld [vmem:[#allocation12 + $0x8] sm:$0xff]
    %v851 = vadd.f32 %v849, %v847
    %v852 = vadd.f32 %v850, %v848
    %853 = vst.msk [vmem:[#allocation12] sm:$0xff] %vm238, %v851
    %854 = vst.msk [vmem:[#allocation12 + $0x8] sm:$0xff] %vm238, %v852
    %855 = vrot.lane.b32.xlu0 %v233, 104
    %v856 = vpop.permute.xlu0 %855
    %v859 = vsel %vm238, %v845, 0
    %861 = vmatpush.msra.mxu0 0.0
    %862 = vmatpush.msra.mxu0 0.0
    %863 = vmatpush.msra.mxu0 0.0
    %864 = vmatpush.msra.mxu0 0.0
    %865 = vmatpush.msra.mxu0 0.0
    %866 = vmatpush.msra.mxu0 0.0
    %867 = vmatpush.msra.mxu0 0.0
    %868 = vmatpush.msra.mxu0 0.0
    %869 = vmatpush.msra.mxu0 0.0
    %870 = vmatpush.msra.mxu0 0.0
    %871 = vmatpush.msra.mxu0 0.0
    %872 = vmatpush.msra.mxu0 0.0
    %873 = vmatpush.msra.mxu0 0.0
    %874 = vmatpush.msra.mxu0 0.0
    %875 = vmatpush.msra.mxu0 0.0
    %876 = vmatpush.msra.mxu0 %v856
    %877 = vmatmul.f32.gmra.mxu0 %v859
    %v878 = vpop.f32.mrf.mxu0
    %v879 = vadd.f32 0.0, %v878
    %880 = vdwg.mxu0
    %881 = vrot.lane.b32.xlu0 %v236, 104
    %v882 = vpop.permute.xlu0 %881
    %v885 = vsel %vm238, %v846, 0
    %887 = vmatpush.msra.mxu0 0.0
    %888 = vmatpush.msra.mxu0 0.0
    %889 = vmatpush.msra.mxu0 0.0
    %890 = vmatpush.msra.mxu0 0.0
    %891 = vmatpush.msra.mxu0 0.0
    %892 = vmatpush.msra.mxu0 0.0
    %893 = vmatpush.msra.mxu0 0.0
    %894 = vmatpush.msra.mxu0 0.0
    %895 = vmatpush.msra.mxu0 0.0
    %896 = vmatpush.msra.mxu0 0.0
    %897 = vmatpush.msra.mxu0 0.0
    %898 = vmatpush.msra.mxu0 0.0
    %899 = vmatpush.msra.mxu0 0.0
    %900 = vmatpush.msra.mxu0 0.0
    %901 = vmatpush.msra.mxu0 0.0
    %902 = vmatpush.msra.mxu0 %v882
    %903 = vmatmul.f32.gmra.mxu0 %v885
    %v904 = vpop.f32.mrf.mxu0
    %v905 = vadd.f32 0.0, %v904
    %906 = vdwg.mxu0
    %909 = vrot.lane.b32.xlu0 %v879, 24
    %v910 = vpop.permute.xlu0 %909
    %911 = vrot.lane.b32.xlu0 %v905, 24
    %v912 = vpop.permute.xlu0 %911
    %vm915 = vcmask 261312
    %916 = vst.msk [vmem:[#allocation2] sm:$0xff] %vm915, %v910
    %917 = vst.msk [vmem:[#allocation2 + $0x8] sm:$0xff] %vm915, %v912
    %v918 = vld [vmem:[#allocation2] sm:$0xff]
    %v919 = vld [vmem:[#allocation2 + $0x8] sm:$0xff]
    %v920 = vld [vmem:[#allocation8] sm:$0xff]
    %v921 = vld [vmem:[#allocation8 + $0x8] sm:$0xff]
    %v922 = vld [vmem:[#allocation8 + $0x10] sm:$0xff]
    %v923 = vld [vmem:[#allocation8 + $0x18] sm:$0xff]
    %v924 = vld [vmem:[%s9] sm:$0x1]
    %v926 = vperm.slane %v924, 0
    %v929 = vsel %vm140, %v918, 0
    %v932 = vsel %vm140, %v919, 0
    %934 = vmatpush.msra.mxu0 0.0
    %935 = vmatpush.msra.mxu0 0.0
    %936 = vmatpush.msra.mxu0 0.0
    %937 = vmatpush.msra.mxu0 0.0
    %938 = vmatpush.msra.mxu0 0.0
    %939 = vmatpush.msra.mxu0 0.0
    %940 = vmatpush.msra.mxu0 0.0
    %941 = vmatpush.msra.mxu0 0.0
    %942 = vmatpush.msra.mxu0 0.0
    %943 = vmatpush.msra.mxu0 0.0
    %944 = vmatpush.msra.mxu0 0.0
    %945 = vmatpush.msra.mxu0 0.0
    %946 = vmatpush.msra.mxu0 %v923
    %947 = vmatpush.msra.mxu0 %v922
    %948 = vmatpush.msra.mxu0 %v921
    %949 = vmatpush.msra.mxu0 %v920
    %950 = vmatmul.f32.gmra.mxu0 %v929
    %v951 = vpop.f32.mrf.mxu0
    %v952 = vadd.f32 %v926, %v951
    %953 = vmatmul.f32.gmra.mxu0 %v932
    %v954 = vpop.f32.mrf.mxu0
    %v955 = vadd.f32 %v926, %v954
    %956 = vdwg.mxu0
    %v957 = vadd.f32 %v126, %v952
    %v958 = vadd.f32 %v127, %v955
    %v959 = vld [vmem:[%s10] sm:$0x1]
    %v960 = vld [vmem:[%s11] sm:$0x1]
    %v961 = vsel %vm140, %v957, 0.0
    %962 = vadd.xlane.f32.xlu0 %v961
    %v963 = vpop.xlane.xlu0 %962
    %v964 = vsel %vm140, %v958, 0.0
    %965 = vadd.xlane.f32.xlu0 %v964
    %v966 = vpop.xlane.xlu0 %965
    %v967 = vrcp.pop 32.0
    %v968 = vmul.f32 32.0, %v967
    %v969 = vsub.f32 1.0, %v968
    %v970 = vmul.f32 %v967, %v969
    %v971 = vadd.f32 %v967, %v970
    %vm972 = vweird.f32 %v967
    %v973 = vsel %vm972, %v967, %v971
    %v974 = vmul.f32 %v963, %v973
    %v975 = vmul.f32 %v966, %v973
    %v976 = vsub.f32 %v957, %v974
    %v977 = vsub.f32 %v958, %v975
    %v978 = vmul.f32 %v976, %v976
    %v979 = vmul.f32 %v977, %v977
    %v980 = vsel %vm140, %v978, 0.0
    %981 = vadd.xlane.f32.xlu0 %v980
    %v982 = vpop.xlane.xlu0 %981
    %v983 = vsel %vm140, %v979, 0.0
    %984 = vadd.xlane.f32.xlu0 %v983
    %v985 = vpop.xlane.xlu0 %984
    %v986 = vmul.f32 %v982, %v973
    %v987 = vmul.f32 %v985, %v973
    %v988 = vadd.f32 %v986, 1e-05
    %v989 = vadd.f32 %v987, 1e-05
    %v990 = vrsqrt.pop %v988
    %v991 = vmul.f32 %v990, %v988
    %v992 = vmul.f32 %v991, %v990
    %v993 = vmul.f32 0.5, %v992
    %v994 = vsub.f32 1.5, %v993
    %v995 = vmul.f32 %v990, %v994
    %vm996 = vweird.f32 %v988
    %vm997 = vweird.f32 %v990
    %vm998 = vmor %vm996, %vm997
    %v999 = vsel %vm998, %v990, %v995
    %v1000 = vrsqrt.pop %v989
    %v1001 = vmul.f32 %v1000, %v989
    %v1002 = vmul.f32 %v1001, %v1000
    %v1003 = vmul.f32 0.5, %v1002
    %v1004 = vsub.f32 1.5, %v1003
    %v1005 = vmul.f32 %v1000, %v1004
    %vm1006 = vweird.f32 %v989
    %vm1007 = vweird.f32 %v1000
    %vm1008 = vmor %vm1006, %vm1007
    %v1009 = vsel %vm1008, %v1000, %v1005
    %v1010 = vmul.f32 %v976, %v999
    %v1011 = vmul.f32 %v977, %v1009
    %v1013 = vperm.slane %v959, 0
    %v1015 = vmul.f32 %v1010, %v1013
    %v1016 = vmul.f32 %v1011, %v1013
    %v1018 = vperm.slane %v960, 0
    %v1020 = vadd.f32 %v1015, %v1018
    %v1021 = vadd.f32 %v1016, %v1018
    %v1022 = vld [vmem:[#allocation9] sm:$0xff]
    %v1023 = vld [vmem:[#allocation9 + $0x8] sm:$0xff]
    %v1024 = vld [vmem:[#allocation9 + $0x10] sm:$0xff]
    %v1025 = vld [vmem:[#allocation9 + $0x18] sm:$0xff]
    %v1026 = vld [vmem:[%s13] sm:$0x1]
    %v1028 = vperm.slane %v1026, 0
    %v1031 = vsel %vm140, %v1020, 0
    %v1034 = vsel %vm140, %v1021, 0
    %1036 = vmatpush.msra.mxu0 0.0
    %1037 = vmatpush.msra.mxu0 0.0
    %1038 = vmatpush.msra.mxu0 0.0
    %1039 = vmatpush.msra.mxu0 0.0
    %1040 = vmatpush.msra.mxu0 0.0
    %1041 = vmatpush.msra.mxu0 0.0
    %1042 = vmatpush.msra.mxu0 0.0
    %1043 = vmatpush.msra.mxu0 0.0
    %1044 = vmatpush.msra.mxu0 0.0
    %1045 = vmatpush.msra.mxu0 0.0
    %1046 = vmatpush.msra.mxu0 0.0
    %1047 = vmatpush.msra.mxu0 0.0
    %1048 = vmatpush.msra.mxu0 %v1025
    %1049 = vmatpush.msra.mxu0 %v1024
    %1050 = vmatpush.msra.mxu0 %v1023
    %1051 = vmatpush.msra.mxu0 %v1022
    %1052 = vmatmul.f32.gmra.mxu0 %v1031
    %v1053 = vpop.f32.mrf.mxu0
    %v1054 = vadd.f32 %v1028, %v1053
    %1055 = vmatmul.f32.gmra.mxu0 %v1034
    %v1056 = vpop.f32.mrf.mxu0
    %v1057 = vadd.f32 %v1028, %v1056
    %1058 = vdwg.mxu0
    %v1059 = vmax.f32 %v1054, 0.0
    %v1060 = vmax.f32 %v1057, 0.0
    %v1061 = vld [vmem:[%s14] sm:$0xff]
    %v1062 = vld [vmem:[%s14 + $0x8] sm:$0xff]
    %v1063 = vld [vmem:[%s14 + $0x10] sm:$0xff]
    %v1064 = vld [vmem:[%s14 + $0x18] sm:$0xff]
    %v1065 = vld [vmem:[%s14 + $0x20] sm:$0xff]
    %v1066 = vld [vmem:[%s14 + $0x28] sm:$0xff]
    %v1067 = vld [vmem:[%s14 + $0x30] sm:$0xff]
    %v1068 = vld [vmem:[%s14 + $0x38] sm:$0xff]
    %v1069 = vld [vmem:[%s15] sm:$0x1]
    %v1071 = vperm.slane %v1069, 0
    %vm1073 = vcmask 523264
    %v1075 = vsel %vm1073, %v1059, 0
    %v1078 = vsel %vm1073, %v1060, 0
    %1080 = vmatpush.msra.mxu0 0.0
    %1081 = vmatpush.msra.mxu0 0.0
    %1082 = vmatpush.msra.mxu0 0.0
    %1083 = vmatpush.msra.mxu0 0.0
    %1084 = vmatpush.msra.mxu0 0.0
    %1085 = vmatpush.msra.mxu0 0.0
    %1086 = vmatpush.msra.mxu0 0.0
    %1087 = vmatpush.msra.mxu0 0.0
    %1088 = vmatpush.msra.mxu0 %v1068
    %1089 = vmatpush.msra.mxu0 %v1067
    %1090 = vmatpush.msra.mxu0 %v1066
    %1091 = vmatpush.msra.mxu0 %v1065
    %1092 = vmatpush.msra.mxu0 %v1064
    %1093 = vmatpush.msra.mxu0 %v1063
    %1094 = vmatpush.msra.mxu0 %v1062
    %1095 = vmatpush.msra.mxu0 %v1061
    %1096 = vmatmul.f32.gmra.mxu0 %v1075
    %v1097 = vpop.f32.mrf.mxu0
    %v1098 = vadd.f32 %v1071, %v1097
    %1099 = vmatmul.f32.gmra.mxu0 %v1078
    %v1100 = vpop.f32.mrf.mxu0
    %v1101 = vadd.f32 %v1071, %v1100
    %1102 = vdwg.mxu0
    %v1103 = vadd.f32 %v1020, %v1098
    %v1104 = vadd.f32 %v1021, %v1101
    %v1105 = vld [vmem:[%s16] sm:$0x1]
    %v1106 = vld [vmem:[%s17] sm:$0x1]
    %v1107 = vsel %vm140, %v1103, 0.0
    %1108 = vadd.xlane.f32.xlu0 %v1107
    %v1109 = vpop.xlane.xlu0 %1108
    %v1110 = vsel %vm140, %v1104, 0.0
    %1111 = vadd.xlane.f32.xlu0 %v1110
    %v1112 = vpop.xlane.xlu0 %1111
    %v1113 = vmul.f32 %v1109, %v973
    %v1114 = vmul.f32 %v1112, %v973
    %v1115 = vsub.f32 %v1103, %v1113
    %v1116 = vsub.f32 %v1104, %v1114
    %v1117 = vmul.f32 %v1115, %v1115
    %v1118 = vmul.f32 %v1116, %v1116
    %v1119 = vsel %vm140, %v1117, 0.0
    %1120 = vadd.xlane.f32.xlu0 %v1119
    %v1121 = vpop.xlane.xlu0 %1120
    %v1122 = vsel %vm140, %v1118, 0.0
    %1123 = vadd.xlane.f32.xlu0 %v1122
    %v1124 = vpop.xlane.xlu0 %1123
    %v1125 = vmul.f32 %v1121, %v973
    %v1126 = vmul.f32 %v1124, %v973
    %v1127 = vadd.f32 %v1125, 1e-05
    %v1128 = vadd.f32 %v1126, 1e-05
    %v1129 = vrsqrt.pop %v1127
    %v1130 = vmul.f32 %v1129, %v1127
    %v1131 = vmul.f32 %v1130, %v1129
    %v1132 = vmul.f32 0.5, %v1131
    %v1133 = vsub.f32 1.5, %v1132
    %v1134 = vmul.f32 %v1129, %v1133
    %vm1135 = vweird.f32 %v1127
    %vm1136 = vweird.f32 %v1129
    %vm1137 = vmor %vm1135, %vm1136
    %v1138 = vsel %vm1137, %v1129, %v1134
    %v1139 = vrsqrt.pop %v1128
    %v1140 = vmul.f32 %v1139, %v1128
    %v1141 = vmul.f32 %v1140, %v1139
    %v1142 = vmul.f32 0.5, %v1141
    %v1143 = vsub.f32 1.5, %v1142
    %v1144 = vmul.f32 %v1139, %v1143
    %vm1145 = vweird.f32 %v1128
    %vm1146 = vweird.f32 %v1139
    %vm1147 = vmor %vm1145, %vm1146
    %v1148 = vsel %vm1147, %v1139, %v1144
    %v1149 = vmul.f32 %v1115, %v1138
    %v1150 = vmul.f32 %v1116, %v1148
    %v1152 = vperm.slane %v1105, 0
    %v1154 = vmul.f32 %v1149, %v1152
    %v1155 = vmul.f32 %v1150, %v1152
    %v1157 = vperm.slane %v1106, 0
    %v1159 = vadd.f32 %v1154, %v1157
    %v1160 = vadd.f32 %v1155, %v1157
    %1161 = vst.msk [vmem:[#allocation11] sm:$0xff] %vm140, %v1159
    %1162 = vst.msk [vmem:[#allocation11 + $0x8] sm:$0xff] %vm140, %v1160
    // Predicated region
    $region90: #{tpu_custom_call.1} parent=1 // pred_check
      _
    $region91: #{tpu_custom_call.1} parent=1 // pred_check_branch
      %1164 = sbr.rel (0) target = $region93
    $region92: #{tpu_custom_call.1} parent=1 // pred_region
      %1166 = vsyncadd [#allocation5], 0
      %s1167 = sshll.u32 [#allocation11], 4
      %s1168 = int_to_ptr.vmem [resolvable:$true] %s1167
      %s1169 = sshll.u32 %s18, 4
      %s1170 = int_to_ptr.hbm [resolvable:$true] %s1169
      %1175 = dma.vmem_to_hbm [thread:$0]  %s1168, 256, %s1170, [#allocation5], 128, 128, 8
    $region93: #{tpu_custom_call.1} parent=1 // pred_fallthru
      _
    // Predicated region
    $region94: #{tpu_custom_call.1} parent=1 // pred_check
      _
    $region95: #{tpu_custom_call.1} parent=1 // pred_check_branch
      %1177 = sbr.rel (0) target = $region97
    $region96: #{tpu_custom_call.1} parent=1 // pred_region
      %1179 = vsyncadd [#allocation13], 0
      %s1180 = sshll.u32 [#allocation12], 4
      %s1181 = int_to_ptr.vmem [resolvable:$true] %s1180
      %s1182 = sshll.u32 %s19, 4
      %s1183 = int_to_ptr.hbm [resolvable:$true] %s1182
      %1188 = dma.vmem_to_hbm [thread:$0]  %s1181, 256, %s1183, [#allocation13], 128, 128, 8
    $region97: #{tpu_custom_call.1} parent=1 // pred_fallthru
      _
    // Predicated region
    $region98: #{tpu_custom_call.1} parent=1 // pred_check
      _
    $region99: #{tpu_custom_call.1} parent=1 // pred_check_branch
      %1190 = sbr.rel (0) target = $region101
    $region100: #{tpu_custom_call.1} parent=1 // pred_region
      %1192 = dma.done [#allocation5], 256
    $region101: #{tpu_custom_call.1} parent=1 // pred_fallthru
      _
    // Predicated region
    $region102: #{tpu_custom_call.1} parent=1 // pred_check
      _
    $region103: #{tpu_custom_call.1} parent=1 // pred_check_branch
      %1194 = sbr.rel (0) target = $region105
    $region104: #{tpu_custom_call.1} parent=1 // pred_region
      %1196 = dma.done [#allocation13], 256
    $region105: #{tpu_custom_call.1} parent=1 // pred_fallthru
      _
    %1197 = vsyncpa [#allocation4], 1
    %1198 = vsyncpa [#allocation7], 1
    %1199 = vsyncpa [#allocation10], 1
    %1200 = vsyncpa [#allocation5], 1
    %1201 = vsyncpa [#allocation13], 1

</llo_original>
